<compile_context>
chip_gen: v6e
topology: v6e:2x2x1
jax: 0.10.0
libtpu: 0.0.40
codegen_flags: <defaults>
</compile_context>

<pallas_src>
import math
import functools

import jax
import jax.numpy as jnp
from jax import lax
from jax.experimental import pallas as pl
from jax.experimental.pallas import tpu as pltpu


def _self_attention_kernel(num_heads,
                           q_ref, k_ref, v_ref,      # (nb, Lq, D), (nb, L, D), (nb, L, D)
                           w_ref, b_ref,             # (3H, hd, D), (3H, 1, hd)
                           gamma_ref, beta_ref,      # (1, D), (1, D)
                           o_ref,                    # (nb, Lq, D)
                           ctx_ref):                 # VMEM scratch (Lq, D) f32
    nb, Lq, D = q_ref.shape
    _, L, _ = k_ref.shape
    H = num_heads
    hd = D // H

    # Resident parameters, loaded once per grid step (hoisted out of the loop).
    w_all = w_ref[...]
    b_all = b_ref[...]
    gamma = gamma_ref[...]
    beta = beta_ref[...]

    # dot_general dimension numbers (batch dim 0 everywhere):
    dn_proj = (((2,), (2,)), ((0,), (0,)))    # (B,L,D) . (B,hd,D) -> (B,L,hd)
    dn_scores = (((2,), (2,)), ((0,), (0,)))  # 'hqd,hkd->hqk'
    dn_ctx = (((2,), (1,)), ((0,), (0,)))     # 'hqk,hkd->hqd'

    for n in range(nb):   # static unroll over batch elements in this block
        x_q = q_ref[n].astype(jnp.float32)    # (Lq, D)
        x_k = k_ref[n].astype(jnp.float32)    # (L,  D)
        x_v = v_ref[n].astype(jnp.float32)    # (L,  D)

        if Lq == L:
            # Fused QKV: one batched matmul over all 3*H per-head projections.
            x_all = jnp.concatenate(
                [jnp.broadcast_to(x_q, (H, L, D)),
                 jnp.broadcast_to(x_k, (H, L, D)),
                 jnp.broadcast_to(x_v, (H, L, D))], axis=0)        # (3H, L, D)
            qkv = lax.dot_general(x_all, w_all, dn_proj,
                                  preferred_element_type=jnp.float32) + b_all
            q_h = qkv[0:H]            # (H, Lq, hd)  -- 1/sqrt(hd) already folded in
            k_h = qkv[H:2 * H]        # (H, L,  hd)
            v_h = qkv[2 * H:3 * H]    # (H, L,  hd)
        else:
            # General path when Lq != L: three head-batched projections.
            q_h = lax.dot_general(jnp.broadcast_to(x_q, (H, Lq, D)),
                                  w_all[0:H], dn_proj,
                                  preferred_element_type=jnp.float32) + b_all[0:H]
            k_h = lax.dot_general(jnp.broadcast_to(x_k, (H, L, D)),
                                  w_all[H:2 * H], dn_proj,
                                  preferred_element_type=jnp.float32) + b_all[H:2 * H]
            v_h = lax.dot_general(jnp.broadcast_to(x_v, (H, L, D)),
                                  w_all[2 * H:3 * H], dn_proj,
                                  preferred_element_type=jnp.float32) + b_all[2 * H:3 * H]

        # Head-batched scaled dot-product attention (scale folded into Wq/bq).
        s = lax.dot_general(q_h, k_h, dn_scores,
                            preferred_element_type=jnp.float32)     # (H, Lq, L)
        s = s - jnp.max(s, axis=-1, keepdims=True)
        e = jnp.exp(s)
        p = e * pl.reciprocal(jnp.sum(e, axis=-1, keepdims=True), approx=True)
        ctx_h = lax.dot_general(p, v_h, dn_ctx,
                                preferred_element_type=jnp.float32)  # (H, Lq, hd)

        # Merge heads into a lane-dense (Lq, D) slab via VMEM scratch
        # (no per-head concatenate on the lane axis).
        for h in range(H):
            ctx_ref[:, h * hd:(h + 1) * hd] = ctx_h[h]
        ctx = ctx_ref[...] + x_q                     # residual: += query_states

        # LayerNorm over features (eps = 1e-6, biased variance, like torch).
        mean = jnp.mean(ctx, axis=-1, keepdims=True)
        c = ctx - mean
        var = jnp.mean(c * c, axis=-1, keepdims=True)
        out = c * lax.rsqrt(var + 1e-6) * gamma + beta

        o_ref[n] = out.astype(o_ref.dtype)


def prepare_params(raw, num_heads):
    """One-time host-side param prep.

    raw weights are torch-layout nn.Linear params: W (D_out, D_in), b (D,).
    Produces head-major fused tensors with 1/sqrt(head_dim) folded into Q.
    """
    D = raw["wq"].shape[0]
    hd = D // num_heads
    inv_s = 1.0 / math.sqrt(hd)

    def heads_w(w):            # (D_out, D_in) -> (H, hd, D_in)
        return w.reshape(num_heads, hd, D)

    def heads_b(b):            # (D_out,) -> (H, 1, hd)
        return b.reshape(num_heads, hd)[:, None, :]

    w_all = jnp.concatenate([heads_w(raw["wq"] * inv_s),
                             heads_w(raw["wk"]),
                             heads_w(raw["wv"])], axis=0)        # (3H, hd, D)
    b_all = jnp.concatenate([heads_b(raw["bq"] * inv_s),
                             heads_b(raw["bk"]),
                             heads_b(raw["bv"])], axis=0)        # (3H, 1, hd)
    return {"w_all": w_all, "b_all": b_all,
            "gamma": raw["gamma"].reshape(1, D),
            "beta": raw["beta"].reshape(1, D)}


def self_attention_forward(query_states, key_states, value_states, params,
                           num_heads):
    """query_states: (N, Lq, D); key/value_states: (N, L, D)."""
    N, Lq, D = query_states.shape
    _, L, _ = key_states.shape

    # Batch super-blocking: >= 2 "parallel" grid steps when possible (v7x has
    # two TensorCores), with a bounded per-step unroll for large batches.
    if N >= 2 and N % 2 == 0:
        num_blocks = 2
        nb = N // num_blocks
        while nb > 4 and N % (num_blocks * 2) == 0:
            num_blocks *= 2
            nb = N // num_blocks
    else:
        num_blocks, nb = max(N, 1), 1

    kernel = functools.partial(_self_attention_kernel, num_heads)

    def resident():
        # Whole-array, pipeline-free VMEM residency for parameters.
        return pl.BlockSpec(memory_space=pltpu.MemorySpace.VMEM)

    return pl.pallas_call(
        kernel,
        out_shape=jax.ShapeDtypeStruct((N, Lq, D), query_states.dtype),
        grid_spec=pltpu.PrefetchScalarGridSpec(
            num_scalar_prefetch=0,
            grid=(num_blocks,),
            in_specs=[
                pl.BlockSpec((nb, Lq, D), lambda b: (b, 0, 0)),   # query
                pl.BlockSpec((nb, L, D), lambda b: (b, 0, 0)),    # key
                pl.BlockSpec((nb, L, D), lambda b: (b, 0, 0)),    # value
                resident(),                                       # w_all
                resident(),                                       # b_all
                resident(),                                       # gamma
                resident(),                                       # beta
            ],
            out_specs=pl.BlockSpec((nb, Lq, D), lambda b: (b, 0, 0)),
            scratch_shapes=[pltpu.VMEM((Lq, D), jnp.float32)],
        ),
        compiler_params=pltpu.CompilerParams(
            dimension_semantics=("parallel",)),
    )(query_states, key_states, value_states,
      params["w_all"], params["b_all"], params["gamma"], params["beta"])


def _reference(query_states, key_states, value_states, raw, num_heads):
    """Pure-JAX reference matching the PyTorch forward (eval mode)."""
    N, Lq, D = query_states.shape
    hd = D // num_heads

    def split(x):  # (N, L, D) -> (N, H, L, hd)
        return x.reshape(x.shape[0], x.shape[1], num_heads, hd).transpose(0, 2, 1, 3)

    q = split(query_states @ raw["wq"].T + raw["bq"])
    k = split(key_states @ raw["wk"].T + raw["bk"])
    v = split(value_states @ raw["wv"].T + raw["bv"])

    scores = jnp.einsum("nhqd,nhkd->nhqk", q, k) / math.sqrt(hd)
    probs = jax.nn.softmax(scores, axis=-1)
    ctx = jnp.einsum("nhqk,nhkd->nhqd", probs, v)
    ctx = ctx.transpose(0, 2, 1, 3).reshape(N, Lq, D)
    ctx = ctx + query_states

    mean = jnp.mean(ctx, axis=-1, keepdims=True)
    var = jnp.mean((ctx - mean) ** 2, axis=-1, keepdims=True)
    normed = (ctx - mean) / jnp.sqrt(var + 1e-6)
    return normed * raw["gamma"] + raw["beta"]


if __name__ == "__main__":
    # Small shapes consistent with the module: att_dim=32, att_head=4.
    N, Lq, L, D, H = 2, 8, 8, 32, 4

    key = jax.random.PRNGKey(0)
    keys = jax.random.split(key, 12)

    scale = 1.0 / math.sqrt(D)
    raw = {
        "wq": jax.random.normal(keys[0], (D, D), jnp.float32) * scale,  # torch (out, in)
        "bq": jax.random.normal(keys[1], (D,), jnp.float32) * 0.01,
        "wk": jax.random.normal(keys[2], (D, D), jnp.float32) * scale,
        "bk": jax.random.normal(keys[3], (D,), jnp.float32) * 0.01,
        "wv": jax.random.normal(keys[4], (D, D), jnp.float32) * scale,
        "bv": jax.random.normal(keys[5], (D,), jnp.float32) * 0.01,
        "gamma": jnp.ones((D,), jnp.float32),
        "beta": jnp.zeros((D,), jnp.float32),
    }
    params = prepare_params(raw, H)

    query_states = jax.random.normal(keys[6], (N, Lq, D), jnp.float32)
    key_states = jax.random.normal(keys[7], (N, L, D), jnp.float32)
    value_states = jax.random.normal(keys[8], (N, L, D), jnp.float32)

    out = self_attention_forward(query_states, key_states, value_states, params, H)
    out = jax.block_until_ready(out)

    ref = _reference(query_states, key_states, value_states, raw, H)
    assert out.shape == (N, Lq, D)
    # Tolerance loosened vs 1e-4: approx EUP reciprocal in the softmax
    # denominator perturbs results at the ~1e-3 level.
    assert jnp.allclose(out, ref, atol=3e-3, rtol=3e-3), "mismatch vs JAX reference"

    print("KERNEL_OK")
</pallas_src>

<mosaic_0001>
module attributes {stable_mosaic.version = 11 : i64} {
  func.func @_self_attention_kernel(%arg0: i32, %arg1: memref<1x8x32xf32, #tpu.memory_space<vmem>>, %arg2: memref<1x8x32xf32, #tpu.memory_space<vmem>>, %arg3: memref<1x8x32xf32, #tpu.memory_space<vmem>>, %arg4: memref<12x8x32xf32, #tpu.memory_space<vmem>>, %arg5: memref<12x1x8xf32, #tpu.memory_space<vmem>>, %arg6: memref<1x32xf32, #tpu.memory_space<vmem>>, %arg7: memref<1x32xf32, #tpu.memory_space<vmem>>, %arg8: memref<1x8x32xf32, #tpu.memory_space<vmem>>, %arg9: memref<8x32xf32, #tpu.memory_space<vmem>>) attributes {dimension_semantics = [#tpu.dimension_semantics<parallel>], iteration_bounds = array<i64: 2>, scalar_prefetch = 0 : i64, scratch_operands = 1 : i64, tpu.core_type = #tpu.core_type<tc>, window_params = [{transform_indices = @transform_0, window_bounds = array<i64: 1, 8, 32>}, {transform_indices = @transform_1, window_bounds = array<i64: 1, 8, 32>}, {transform_indices = @transform_2, window_bounds = array<i64: 1, 8, 32>}, {pipeline_mode = #tpu.pipeline_mode<synchronous>, transform_indices = @transform_3, window_bounds = array<i64: 12, 8, 32>}, {pipeline_mode = #tpu.pipeline_mode<synchronous>, transform_indices = @transform_4, window_bounds = array<i64: 12, 1, 8>}, {pipeline_mode = #tpu.pipeline_mode<synchronous>, transform_indices = @transform_5, window_bounds = array<i64: 1, 32>}, {pipeline_mode = #tpu.pipeline_mode<synchronous>, transform_indices = @transform_6, window_bounds = array<i64: 1, 32>}, {transform_indices = @transform_7, window_bounds = array<i64: 1, 8, 32>}]} {
    %c0 = arith.constant 0 : index
    %c0_0 = arith.constant 0 : index
    %c0_1 = arith.constant 0 : index
    %0 = vector.load %arg4[%c0, %c0_0, %c0_1] : memref<12x8x32xf32, #tpu.memory_space<vmem>>, vector<12x8x32xf32>
    %c0_2 = arith.constant 0 : index
    %c0_3 = arith.constant 0 : index
    %c0_4 = arith.constant 0 : index
    %1 = vector.load %arg5[%c0_2, %c0_3, %c0_4] : memref<12x1x8xf32, #tpu.memory_space<vmem>>, vector<12x1x8xf32>
    %c0_5 = arith.constant 0 : index
    %c0_6 = arith.constant 0 : index
    %2 = vector.load %arg6[%c0_5, %c0_6] : memref<1x32xf32, #tpu.memory_space<vmem>>, vector<1x32xf32>
    %c0_7 = arith.constant 0 : index
    %c0_8 = arith.constant 0 : index
    %3 = vector.load %arg7[%c0_7, %c0_8] : memref<1x32xf32, #tpu.memory_space<vmem>>, vector<1x32xf32>
    %c0_9 = arith.constant 0 : index
    %c0_10 = arith.constant 0 : index
    %c0_11 = arith.constant 0 : index
    %4 = vector.load %arg1[%c0_9, %c0_10, %c0_11] : memref<1x8x32xf32, #tpu.memory_space<vmem>>, vector<1x8x32xf32>
    %5 = vector.shape_cast %4 : vector<1x8x32xf32> to vector<8x32xf32>
    %c0_12 = arith.constant 0 : index
    %c0_13 = arith.constant 0 : index
    %c0_14 = arith.constant 0 : index
    %6 = vector.load %arg2[%c0_12, %c0_13, %c0_14] : memref<1x8x32xf32, #tpu.memory_space<vmem>>, vector<1x8x32xf32>
    %7 = vector.shape_cast %6 : vector<1x8x32xf32> to vector<8x32xf32>
    %c0_15 = arith.constant 0 : index
    %c0_16 = arith.constant 0 : index
    %c0_17 = arith.constant 0 : index
    %8 = vector.load %arg3[%c0_15, %c0_16, %c0_17] : memref<1x8x32xf32, #tpu.memory_space<vmem>>, vector<1x8x32xf32>
    %9 = vector.shape_cast %8 : vector<1x8x32xf32> to vector<8x32xf32>
    %10 = vector.shape_cast %5 : vector<8x32xf32> to vector<1x8x32xf32>
    %11 = vector.broadcast %10 : vector<1x8x32xf32> to vector<4x8x32xf32>
    %12 = vector.shape_cast %7 : vector<8x32xf32> to vector<1x8x32xf32>
    %13 = vector.broadcast %12 : vector<1x8x32xf32> to vector<4x8x32xf32>
    %14 = vector.shape_cast %9 : vector<8x32xf32> to vector<1x8x32xf32>
    %15 = vector.broadcast %14 : vector<1x8x32xf32> to vector<4x8x32xf32>
    %16 = tpu.concatenate %11, %13, %15 in 0 : vector<4x8x32xf32>, vector<4x8x32xf32>, vector<4x8x32xf32> -> vector<12x8x32xf32>
    %cst = arith.constant dense<0.000000e+00> : vector<12x8x8xf32>
    %17 = tpu.matmul %16, %0, %cst {dimension_numbers = #tpu.dot_dimension_numbers<[2], [2], [1], [1], [0, 0, 0, 1, 1, 1], [0], [0]>} : vector<12x8x32xf32>, vector<12x8x32xf32>, vector<12x8x8xf32> -> vector<12x8x8xf32>
    %18 = vector.broadcast %1 : vector<12x1x8xf32> to vector<12x8x8xf32>
    %19 = arith.addf %17, %18 : vector<12x8x8xf32>
    %20 = vector.extract_strided_slice %19 {offsets = [0, 0, 0], sizes = [4, 8, 8], strides = [1, 1, 1]} : vector<12x8x8xf32> to vector<4x8x8xf32>
    %21 = vector.extract_strided_slice %19 {offsets = [4, 0, 0], sizes = [4, 8, 8], strides = [1, 1, 1]} : vector<12x8x8xf32> to vector<4x8x8xf32>
    %22 = vector.extract_strided_slice %19 {offsets = [8, 0, 0], sizes = [4, 8, 8], strides = [1, 1, 1]} : vector<12x8x8xf32> to vector<4x8x8xf32>
    %cst_18 = arith.constant dense<0.000000e+00> : vector<4x8x8xf32>
    %23 = tpu.matmul %20, %21, %cst_18 {dimension_numbers = #tpu.dot_dimension_numbers<[2], [2], [1], [1], [0, 0, 0, 1, 1, 1], [0], [0]>} : vector<4x8x8xf32>, vector<4x8x8xf32>, vector<4x8x8xf32> -> vector<4x8x8xf32>
    %cst_19 = arith.constant dense<0xFF800000> : vector<4x8xf32>
    %24 = vector.multi_reduction <maximumf>, %23, %cst_19 [2] : vector<4x8x8xf32> to vector<4x8xf32>
    %25 = vector.shape_cast %24 : vector<4x8xf32> to vector<4x8x1xf32>
    %26 = vector.broadcast %25 : vector<4x8x1xf32> to vector<4x8x8xf32>
    %27 = arith.subf %23, %26 : vector<4x8x8xf32>
    %28 = math.exp %27 : vector<4x8x8xf32>
    %cst_20 = arith.constant dense<0.000000e+00> : vector<4x8xf32>
    %29 = vector.multi_reduction <add>, %28, %cst_20 [2] : vector<4x8x8xf32> to vector<4x8xf32>
    %30 = vector.shape_cast %29 : vector<4x8xf32> to vector<4x8x1xf32>
    %31 = tpu.reciprocal %30 {approx = true} : vector<4x8x1xf32> -> vector<4x8x1xf32>
    %32 = vector.broadcast %31 : vector<4x8x1xf32> to vector<4x8x8xf32>
    %33 = arith.mulf %28, %32 : vector<4x8x8xf32>
    %cst_21 = arith.constant dense<0.000000e+00> : vector<4x8x8xf32>
    %34 = tpu.matmul %33, %22, %cst_21 {dimension_numbers = #tpu.dot_dimension_numbers<[2], [1], [1], [2], [0, 0, 0, 1, 1, 2], [0], [0]>} : vector<4x8x8xf32>, vector<4x8x8xf32>, vector<4x8x8xf32> -> vector<4x8x8xf32>
    %35 = vector.extract_strided_slice %34 {offsets = [0, 0, 0], sizes = [1, 8, 8], strides = [1, 1, 1]} : vector<4x8x8xf32> to vector<1x8x8xf32>
    %36 = vector.shape_cast %35 : vector<1x8x8xf32> to vector<8x8xf32>
    %c0_22 = arith.constant 0 : index
    %c0_23 = arith.constant 0 : index
    %37 = vector.load %arg9[%c0_22, %c0_23] : memref<8x32xf32, #tpu.memory_space<vmem>>, vector<8x8xf32>
    tpu.vector_store %arg9[%c0_22, %c0_23], %36 {strides = array<i32>} : memref<8x32xf32, #tpu.memory_space<vmem>>, vector<8x8xf32>,
    %38 = vector.extract_strided_slice %34 {offsets = [1, 0, 0], sizes = [1, 8, 8], strides = [1, 1, 1]} : vector<4x8x8xf32> to vector<1x8x8xf32>
    %39 = vector.shape_cast %38 : vector<1x8x8xf32> to vector<8x8xf32>
    %c0_24 = arith.constant 0 : index
    %c8 = arith.constant 8 : index
    %40 = vector.load %arg9[%c0_24, %c8] : memref<8x32xf32, #tpu.memory_space<vmem>>, vector<8x8xf32>
    tpu.vector_store %arg9[%c0_24, %c8], %39 {strides = array<i32>} : memref<8x32xf32, #tpu.memory_space<vmem>>, vector<8x8xf32>,
    %41 = vector.extract_strided_slice %34 {offsets = [2, 0, 0], sizes = [1, 8, 8], strides = [1, 1, 1]} : vector<4x8x8xf32> to vector<1x8x8xf32>
    %42 = vector.shape_cast %41 : vector<1x8x8xf32> to vector<8x8xf32>
    %c0_25 = arith.constant 0 : index
    %c16 = arith.constant 16 : index
    %43 = vector.load %arg9[%c0_25, %c16] : memref<8x32xf32, #tpu.memory_space<vmem>>, vector<8x8xf32>
    tpu.vector_store %arg9[%c0_25, %c16], %42 {strides = array<i32>} : memref<8x32xf32, #tpu.memory_space<vmem>>, vector<8x8xf32>,
    %44 = vector.extract_strided_slice %34 {offsets = [3, 0, 0], sizes = [1, 8, 8], strides = [1, 1, 1]} : vector<4x8x8xf32> to vector<1x8x8xf32>
    %45 = vector.shape_cast %44 : vector<1x8x8xf32> to vector<8x8xf32>
    %c0_26 = arith.constant 0 : index
    %c24 = arith.constant 24 : index
    %46 = vector.load %arg9[%c0_26, %c24] : memref<8x32xf32, #tpu.memory_space<vmem>>, vector<8x8xf32>
    tpu.vector_store %arg9[%c0_26, %c24], %45 {strides = array<i32>} : memref<8x32xf32, #tpu.memory_space<vmem>>, vector<8x8xf32>,
    %c0_27 = arith.constant 0 : index
    %c0_28 = arith.constant 0 : index
    %47 = vector.load %arg9[%c0_27, %c0_28] : memref<8x32xf32, #tpu.memory_space<vmem>>, vector<8x32xf32>
    %48 = arith.addf %47, %5 : vector<8x32xf32>
    %cst_29 = arith.constant dense<0.000000e+00> : vector<8xf32>
    %49 = vector.multi_reduction <add>, %48, %cst_29 [1] : vector<8x32xf32> to vector<8xf32>
    %50 = vector.shape_cast %49 : vector<8xf32> to vector<8x1xf32>
    %cst_30 = arith.constant 3.200000e+01 : f32
    %51 = vector.broadcast %cst_30 : f32 to vector<8x1xf32>
    %52 = arith.divf %50, %51 : vector<8x1xf32>
    %53 = vector.broadcast %52 : vector<8x1xf32> to vector<8x32xf32>
    %54 = arith.subf %48, %53 : vector<8x32xf32>
    %55 = arith.mulf %54, %54 : vector<8x32xf32>
    %cst_31 = arith.constant dense<0.000000e+00> : vector<8xf32>
    %56 = vector.multi_reduction <add>, %55, %cst_31 [1] : vector<8x32xf32> to vector<8xf32>
    %57 = vector.shape_cast %56 : vector<8xf32> to vector<8x1xf32>
    %cst_32 = arith.constant 3.200000e+01 : f32
    %58 = vector.broadcast %cst_32 : f32 to vector<8x1xf32>
    %59 = arith.divf %57, %58 : vector<8x1xf32>
    %cst_33 = arith.constant 9.99999997E-7 : f32
    %60 = vector.broadcast %cst_33 : f32 to vector<8x1xf32>
    %61 = arith.addf %59, %60 : vector<8x1xf32>
    %62 = math.rsqrt %61 : vector<8x1xf32>
    %63 = vector.broadcast %62 : vector<8x1xf32> to vector<8x32xf32>
    %64 = arith.mulf %54, %63 : vector<8x32xf32>
    %65 = vector.broadcast %2 : vector<1x32xf32> to vector<8x32xf32>
    %66 = arith.mulf %64, %65 : vector<8x32xf32>
    %67 = vector.broadcast %3 : vector<1x32xf32> to vector<8x32xf32>
    %68 = arith.addf %66, %67 : vector<8x32xf32>
    %c0_34 = arith.constant 0 : index
    %c0_35 = arith.constant 0 : index
    %c0_36 = arith.constant 0 : index
    %69 = vector.load %arg8[%c0_34, %c0_35, %c0_36] : memref<1x8x32xf32, #tpu.memory_space<vmem>>, vector<1x8x32xf32>
    %70 = vector.shape_cast %69 : vector<1x8x32xf32> to vector<8x32xf32>
    %71 = vector.shape_cast %68 : vector<8x32xf32> to vector<1x8x32xf32>
    tpu.vector_store %arg8[%c0_34, %c0_35, %c0_36], %71 {strides = array<i32>} : memref<1x8x32xf32, #tpu.memory_space<vmem>>, vector<1x8x32xf32>,
    return
  }
  func.func @transform_0(%arg0: i32) -> (i32, i32, i32) {
    %c0_i32 = arith.constant 0 : i32
    %c0_i32_0 = arith.constant 0 : i32
    %c0_i32_1 = arith.constant 0 : i32
    return %arg0, %c0_i32, %c0_i32_0 : i32, i32, i32
  }
  func.func @transform_1(%arg0: i32) -> (i32, i32, i32) {
    %c0_i32 = arith.constant 0 : i32
    %c0_i32_0 = arith.constant 0 : i32
    %c0_i32_1 = arith.constant 0 : i32
    return %arg0, %c0_i32, %c0_i32_0 : i32, i32, i32
  }
  func.func @transform_2(%arg0: i32) -> (i32, i32, i32) {
    %c0_i32 = arith.constant 0 : i32
    %c0_i32_0 = arith.constant 0 : i32
    %c0_i32_1 = arith.constant 0 : i32
    return %arg0, %c0_i32, %c0_i32_0 : i32, i32, i32
  }
  func.func @transform_3(%arg0: i32) -> (i32, i32, i32) {
    %c0_i32 = arith.constant 0 : i32
    %c0_i32_0 = arith.constant 0 : i32
    %c0_i32_1 = arith.constant 0 : i32
    %c0_i32_2 = arith.constant 0 : i32
    return %c0_i32, %c0_i32_0, %c0_i32_1 : i32, i32, i32
  }
  func.func @transform_4(%arg0: i32) -> (i32, i32, i32) {
    %c0_i32 = arith.constant 0 : i32
    %c0_i32_0 = arith.constant 0 : i32
    %c0_i32_1 = arith.constant 0 : i32
    %c0_i32_2 = arith.constant 0 : i32
    return %c0_i32, %c0_i32_0, %c0_i32_1 : i32, i32, i32
  }
  func.func @transform_5(%arg0: i32) -> (i32, i32) {
    %c0_i32 = arith.constant 0 : i32
    %c0_i32_0 = arith.constant 0 : i32
    %c0_i32_1 = arith.constant 0 : i32
    return %c0_i32, %c0_i32_0 : i32, i32
  }
  func.func @transform_6(%arg0: i32) -> (i32, i32) {
    %c0_i32 = arith.constant 0 : i32
    %c0_i32_0 = arith.constant 0 : i32
    %c0_i32_1 = arith.constant 0 : i32
    return %c0_i32, %c0_i32_0 : i32, i32
  }
  func.func @transform_7(%arg0: i32) -> (i32, i32, i32) {
    %c0_i32 = arith.constant 0 : i32
    %c0_i32_0 = arith.constant 0 : i32
    %c0_i32_1 = arith.constant 0 : i32
    return %arg0, %c0_i32, %c0_i32_0 : i32, i32, i32
  }
}

</mosaic_0001>

<llo_original>
// kernel: tpu_custom_call.1
$region0: #{tpu_custom_call.1}
  #allocation0 [shape = 'u32[]', space=smem, size = 0x4, offset = 0x4, fixed_abs, tag = 'smem constant byte address 0x4 - core index']
  #allocation1 [shape = 'u32[144,128]{1,0:T(1,128)}', space=vmem, size = 0x12000, scoped, tag = 'internal scratch']
  #allocation2 [shape = 'f32[8,32]{1,0:T(8,128)}', space=vmem, size = 0x1000, scoped, tag = 'scratch operand']
  %s0 = inlined_call_operand.vmem [shape: f32[2,8,32], index: 0, kind: input, shape index: {}]
  %s1 = inlined_call_operand.hbm [shape: f32[2,8,32], index: 1, kind: input, shape index: {}]
  %s2 = inlined_call_operand.hbm [shape: f32[2,8,32], index: 2, kind: input, shape index: {}]
  %s3 = inlined_call_operand.hbm [shape: f32[12,8,32], index: 3, kind: input, shape index: {}]
  %s4 = inlined_call_operand.vmem [shape: f32[12,1,8], index: 4, kind: input, shape index: {}]
  %s5 = inlined_call_operand.vmem [shape: f32[1,32], index: 5, kind: input, shape index: {}]
  %s6 = inlined_call_operand.vmem [shape: f32[1,32], index: 6, kind: input, shape index: {}]
  %s7 = inlined_call_operand.hbm [shape: f32[2,8,32], index: 7, kind: output, shape index: {}]
  %s8 = sld [smem:[#allocation0]]
  $region73: #{tpu_custom_call.1} parent=0
    _
  %s10 = ssub.s32 1, %s8
  %s11 = scalar_select 0, %s10, %s8
  $region1: #{tpu_custom_call.1} parent=0
    #allocation3 [shape = 'u8[8192]{0}', space=vmem, size = 0x2000, scoped, tag = 'input window, operand 1']
    #allocation4 [shape = 's32[2]{0}', space=sflag, size = 0x8, scoped, tag = 'scoped memory for tpu_custom_call.1']
    #allocation5 [shape = 's32[2]{0}', space=sflag, size = 0x8, scoped, tag = 'scoped memory for tpu_custom_call.1']
    #allocation6 [shape = 'u8[8192]{0}', space=vmem, size = 0x2000, scoped, tag = 'input window, operand 2']
    #allocation7 [shape = 's32[2]{0}', space=sflag, size = 0x8, scoped, tag = 'scoped memory for tpu_custom_call.1']
    #allocation8 [shape = 'u8[49152]{0}', space=vmem, size = 0xc000, scoped, tag = 'input window, operand 3, single buffered']
    #allocation9 [shape = 'u8[8192]{0}', space=vmem, size = 0x2000, scoped, tag = 'output window, operand 0']
    %12 = vsyncpa [#allocation4], 0
    %s13 = scalar_lea.sflag [#allocation4], 1
    %14 = vsyncpa %s13, 0
    %15 = vsyncpa [#allocation7], 0
    %s16 = scalar_lea.sflag [#allocation7], 1
    %17 = vsyncpa %s16, 0
    %18 = vsyncpa [#allocation5], 0
    %s19 = scalar_lea.sflag [#allocation5], 1
    %20 = vsyncpa %s19, 0
    loop: start=0, step=1, limit=4
    $region2: #{tpu_custom_call.1} parent=1 // loop_pre_header
      _
    $region3: #{tpu_custom_call.1} parent=1 // loop_header
      %s22 = sphi 0, %s26
      %p23 = scmp.ge.s32.totalorder %s22, 4
      %s32 = sphi 0, %s34
      %s35 = sphi 0, %s32
      %s36 = sphi 0, %s35
      %s52 = sphi 0, %s36
      %s58 = sphi 0, %s60
      %s61 = sphi 0, %s58
      %s62 = sphi 0, %s61
      %s78 = sphi 0, %s62
      %s84 = sphi 0, %s86
      %s87 = sphi 0, %s84
      %s88 = sphi 0, %s87
      %s104 = sphi 0, %s88
      %s108 = sphi 0, %s108
      %s110 = sphi 0, %s108
      %s111 = sphi 0, %s110
      %s125 = sphi 0, %s111
      %s129 = sphi 0, %s129
      %s131 = sphi 0, %s129
      %s132 = sphi 0, %s131
      %s146 = sphi 0, %s132
      %s150 = sphi 0, %s150
      %s152 = sphi 0, %s150
      %s153 = sphi 0, %s152
      %s167 = sphi 0, %s153
      %s171 = sphi 0, %s171
      %s173 = sphi 0, %s171
      %s174 = sphi 0, %s173
      %s188 = sphi 0, %s174
      %s194 = sphi 0, %s196
      %s197 = sphi 0, %s194
      %s198 = sphi 0, %s197
      %s214 = sphi 0, %s198
    $region4: #{tpu_custom_call.1} parent=1 // loop_header_branch
      %25 = sbr.rel (%p23) target = $region8
    $region5: #{tpu_custom_call.1} parent=1 // loop_body
      %s27 = ssub.s32 %s22, 1
      %s28 = ssub.s32 %s22, 2
      %s29 = sadd.s32 %s22, 1
      %s30 = ssub.s32 %s22, %s29
      %p31 = scmp.eq.s32.totalorder %s30, 0
      %s33 = sadd.s32 %s32, 1
      %s34 = scalar_select %p31, %s32, %s33
      %p37 = pneg %p31
      %p38 = scmp.eq.s32.totalorder %s22, 1
      %p39 = por %p37, %p38
      %p40 = scmp.ne.s32.totalorder %s32, %s35
      %p41 = scmp.eq.s32.totalorder %s22, 0
      %p42 = por %p40, %p41
      %p43 = scmp.ne.s32.totalorder %s32, %s35
      %p44 = scmp.eq.s32.totalorder %s27, 1
      %p45 = por %p43, %p44
      %p46 = scmp.ne.s32.totalorder %s35, %s36
      %p47 = scmp.eq.s32.totalorder %s27, 0
      %p48 = por %p46, %p47
      %p49 = scmp.ne.s32.totalorder %s35, %s36
      %p50 = scmp.eq.s32.totalorder %s28, 1
      %p51 = por %p49, %p50
      %p53 = scmp.ne.s32.totalorder %s36, %s52
      %p54 = scmp.eq.s32.totalorder %s28, 0
      %p55 = por %p53, %p54
      %s56 = ssub.s32 %s22, %s29
      %p57 = scmp.eq.s32.totalorder %s56, 0
      %s59 = sadd.s32 %s58, 1
      %s60 = scalar_select %p57, %s58, %s59
      %p63 = pneg %p57
      %p64 = scmp.eq.s32.totalorder %s22, 1
      %p65 = por %p63, %p64
      %p66 = scmp.ne.s32.totalorder %s58, %s61
      %p67 = scmp.eq.s32.totalorder %s22, 0
      %p68 = por %p66, %p67
      %p69 = scmp.ne.s32.totalorder %s58, %s61
      %p70 = scmp.eq.s32.totalorder %s27, 1
      %p71 = por %p69, %p70
      %p72 = scmp.ne.s32.totalorder %s61, %s62
      %p73 = scmp.eq.s32.totalorder %s27, 0
      %p74 = por %p72, %p73
      %p75 = scmp.ne.s32.totalorder %s61, %s62
      %p76 = scmp.eq.s32.totalorder %s28, 1
      %p77 = por %p75, %p76
      %p79 = scmp.ne.s32.totalorder %s62, %s78
      %p80 = scmp.eq.s32.totalorder %s28, 0
      %p81 = por %p79, %p80
      %s82 = ssub.s32 %s22, %s29
      %p83 = scmp.eq.s32.totalorder %s82, 0
      %s85 = sadd.s32 %s84, 1
      %s86 = scalar_select %p83, %s84, %s85
      %p89 = pneg %p83
      %p90 = scmp.eq.s32.totalorder %s22, 1
      %p91 = por %p89, %p90
      %p92 = scmp.ne.s32.totalorder %s84, %s87
      %p93 = scmp.eq.s32.totalorder %s22, 0
      %p94 = por %p92, %p93
      %p95 = scmp.ne.s32.totalorder %s84, %s87
      %p96 = scmp.eq.s32.totalorder %s27, 1
      %p97 = por %p95, %p96
      %p98 = scmp.ne.s32.totalorder %s87, %s88
      %p99 = scmp.eq.s32.totalorder %s27, 0
      %p100 = por %p98, %p99
      %p101 = scmp.ne.s32.totalorder %s87, %s88
      %p102 = scmp.eq.s32.totalorder %s28, 1
      %p103 = por %p101, %p102
      %p105 = scmp.ne.s32.totalorder %s88, %s104
      %p106 = scmp.eq.s32.totalorder %s28, 0
      %p107 = por %p105, %p106
      %s109 = sadd.s32 %s108, 1
      %p112 = scmp.eq.s32.totalorder %s22, 1
      %p113 = scmp.ne.s32.totalorder %s108, %s110
      %p114 = scmp.eq.s32.totalorder %s22, 0
      %p115 = por %p113, %p114
      %p116 = scmp.ne.s32.totalorder %s108, %s110
      %p117 = scmp.eq.s32.totalorder %s27, 1
      %p118 = por %p116, %p117
      %p119 = scmp.ne.s32.totalorder %s110, %s111
      %p120 = scmp.eq.s32.totalorder %s27, 0
      %p121 = por %p119, %p120
      %p122 = scmp.ne.s32.totalorder %s110, %s111
      %p123 = scmp.eq.s32.totalorder %s28, 1
      %p124 = por %p122, %p123
      %p126 = scmp.ne.s32.totalorder %s111, %s125
      %p127 = scmp.eq.s32.totalorder %s28, 0
      %p128 = por %p126, %p127
      %s130 = sadd.s32 %s129, 1
      %p133 = scmp.eq.s32.totalorder %s22, 1
      %p134 = scmp.ne.s32.totalorder %s129, %s131
      %p135 = scmp.eq.s32.totalorder %s22, 0
      %p136 = por %p134, %p135
      %p137 = scmp.ne.s32.totalorder %s129, %s131
      %p138 = scmp.eq.s32.totalorder %s27, 1
      %p139 = por %p137, %p138
      %p140 = scmp.ne.s32.totalorder %s131, %s132
      %p141 = scmp.eq.s32.totalorder %s27, 0
      %p142 = por %p140, %p141
      %p143 = scmp.ne.s32.totalorder %s131, %s132
      %p144 = scmp.eq.s32.totalorder %s28, 1
      %p145 = por %p143, %p144
      %p147 = scmp.ne.s32.totalorder %s132, %s146
      %p148 = scmp.eq.s32.totalorder %s28, 0
      %p149 = por %p147, %p148
      %s151 = sadd.s32 %s150, 1
      %p154 = scmp.eq.s32.totalorder %s22, 1
      %p155 = scmp.ne.s32.totalorder %s150, %s152
      %p156 = scmp.eq.s32.totalorder %s22, 0
      %p157 = por %p155, %p156
      %p158 = scmp.ne.s32.totalorder %s150, %s152
      %p159 = scmp.eq.s32.totalorder %s27, 1
      %p160 = por %p158, %p159
      %p161 = scmp.ne.s32.totalorder %s152, %s153
      %p162 = scmp.eq.s32.totalorder %s27, 0
      %p163 = por %p161, %p162
      %p164 = scmp.ne.s32.totalorder %s152, %s153
      %p165 = scmp.eq.s32.totalorder %s28, 1
      %p166 = por %p164, %p165
      %p168 = scmp.ne.s32.totalorder %s153, %s167
      %p169 = scmp.eq.s32.totalorder %s28, 0
      %p170 = por %p168, %p169
      %s172 = sadd.s32 %s171, 1
      %p175 = scmp.eq.s32.totalorder %s22, 1
      %p176 = scmp.ne.s32.totalorder %s171, %s173
      %p177 = scmp.eq.s32.totalorder %s22, 0
      %p178 = por %p176, %p177
      %p179 = scmp.ne.s32.totalorder %s171, %s173
      %p180 = scmp.eq.s32.totalorder %s27, 1
      %p181 = por %p179, %p180
      %p182 = scmp.ne.s32.totalorder %s173, %s174
      %p183 = scmp.eq.s32.totalorder %s27, 0
      %p184 = por %p182, %p183
      %p185 = scmp.ne.s32.totalorder %s173, %s174
      %p186 = scmp.eq.s32.totalorder %s28, 1
      %p187 = por %p185, %p186
      %p189 = scmp.ne.s32.totalorder %s174, %s188
      %p190 = scmp.eq.s32.totalorder %s28, 0
      %p191 = por %p189, %p190
      %s192 = ssub.s32 %s22, %s29
      %p193 = scmp.eq.s32.totalorder %s192, 0
      %s195 = sadd.s32 %s194, 1
      %s196 = scalar_select %p193, %s194, %s195
      %p199 = pneg %p193
      %p200 = scmp.eq.s32.totalorder %s22, 1
      %p201 = por %p199, %p200
      %p202 = scmp.ne.s32.totalorder %s194, %s197
      %p203 = scmp.eq.s32.totalorder %s22, 0
      %p204 = por %p202, %p203
      %p205 = scmp.ne.s32.totalorder %s194, %s197
      %p206 = scmp.eq.s32.totalorder %s27, 1
      %p207 = por %p205, %p206
      %p208 = scmp.ne.s32.totalorder %s197, %s198
      %p209 = scmp.eq.s32.totalorder %s27, 0
      %p210 = por %p208, %p209
      %p211 = scmp.ne.s32.totalorder %s197, %s198
      %p212 = scmp.eq.s32.totalorder %s28, 1
      %p213 = por %p211, %p212
      %p215 = scmp.ne.s32.totalorder %s198, %s214
      %p216 = scmp.eq.s32.totalorder %s28, 0
      %p217 = por %p215, %p216
      %p218 = scmp.le.s32.totalorder 1, %s22
      %p219 = scmp.lt.s32.totalorder %s22, 3
      %p220 = pnand %p218, %p219
      %p221 = pneg %p220
      // Predicated region
      $region9: #{tpu_custom_call.1} parent=5 // pred_check
        _
      $region10: #{tpu_custom_call.1} parent=5 // pred_check_branch
        %223 = sbr.rel (%p220) target = $region12
      $region11: #{tpu_custom_call.1} parent=5 // pred_region
        %s224 = ssub.s32 %s22, 1
        // Predicated region
        $region13: #{tpu_custom_call.1} parent=11 // pred_check
          %p225 = pneg %p121
        $region14: #{tpu_custom_call.1} parent=11 // pred_check_branch
          %227 = sbr.rel (%p225) target = $region16
        $region15: #{tpu_custom_call.1} parent=11 // pred_region
          %s229 = ssub.s32 1536, 1536
          %230 = vsyncadd [#allocation7], %s229
          %s231 = sshll.u32 [#allocation8], 4
          %s232 = int_to_ptr.vmem [resolvable:$true] %s231
          %237 = dma.hbm_to_vmem [thread:$0]  %s3, 1536, %s232, [#allocation7], 128, 128, 8
        $region16: #{tpu_custom_call.1} parent=11 // pred_fallthru
          _
        // Predicated region
        $region17: #{tpu_custom_call.1} parent=11 // pred_check
          %p238 = pneg %p142
        $region18: #{tpu_custom_call.1} parent=11 // pred_check_branch
          %240 = sbr.rel (%p238) target = $region20
        $region19: #{tpu_custom_call.1} parent=11 // pred_region
          _
        $region20: #{tpu_custom_call.1} parent=11 // pred_fallthru
          _
        // Predicated region
        $region21: #{tpu_custom_call.1} parent=11 // pred_check
          %p241 = pneg %p163
        $region22: #{tpu_custom_call.1} parent=11 // pred_check_branch
          %243 = sbr.rel (%p241) target = $region24
        $region23: #{tpu_custom_call.1} parent=11 // pred_region
          _
        $region24: #{tpu_custom_call.1} parent=11 // pred_fallthru
          _
        // Predicated region
        $region25: #{tpu_custom_call.1} parent=11 // pred_check
          %p244 = pneg %p184
        $region26: #{tpu_custom_call.1} parent=11 // pred_check_branch
          %246 = sbr.rel (%p244) target = $region28
        $region27: #{tpu_custom_call.1} parent=11 // pred_region
          _
        $region28: #{tpu_custom_call.1} parent=11 // pred_fallthru
          _
      $region12: #{tpu_custom_call.1} parent=5 // pred_fallthru
        _
      %p247 = scmp.lt.s32.totalorder %s22, 2
      // Predicated region
      $region29: #{tpu_custom_call.1} parent=5 // pred_check
        %p248 = pneg %p247
      $region30: #{tpu_custom_call.1} parent=5 // pred_check_branch
        %250 = sbr.rel (%p248) target = $region32
      $region31: #{tpu_custom_call.1} parent=5 // pred_region
        // Predicated region
        $region33: #{tpu_custom_call.1} parent=31 // pred_check
          %p251 = pneg %p42
        $region34: #{tpu_custom_call.1} parent=31 // pred_check_branch
          %253 = sbr.rel (%p251) target = $region36
        $region35: #{tpu_custom_call.1} parent=31 // pred_region
          %p254 = scmp.lt.s32.totalorder %s22, 1
          %s255 = scalar_select %p254, %s22, 1
          %s256 = smul.addr %s255, 8
          %s257 = scalar_lea.vmem %s0, %s256
        $region36: #{tpu_custom_call.1} parent=31 // pred_fallthru
          _
        // Predicated region
        $region37: #{tpu_custom_call.1} parent=31 // pred_check
          %p258 = pneg %p68
        $region38: #{tpu_custom_call.1} parent=31 // pred_check_branch
          %260 = sbr.rel (%p258) target = $region40
        $region39: #{tpu_custom_call.1} parent=31 // pred_region
          %s261 = sand.u32 %s58, 1
          %s262 = scalar_lea.sflag [#allocation4], %s261
          %s263 = sand.u32 %s58, 1
          %s264 = smul.addr %s263, 8
          %s265 = scalar_lea.vmem [#allocation3], %s264
          %s267 = ssub.s32 128, 128
          %268 = vsyncadd %s262, %s267
          %s269 = smul.addr %s22, 128
          %s270 = scalar_lea.hbm %s1, %s269
          %s272 = sshll.u32 %s265, 4
          %s273 = int_to_ptr.vmem [resolvable:$true] %s272
          %275 = dma.hbm_to_vmem [thread:$0]  %s270, 128, %s273, %s262
        $region40: #{tpu_custom_call.1} parent=31 // pred_fallthru
          _
        // Predicated region
        $region41: #{tpu_custom_call.1} parent=31 // pred_check
          %p276 = pneg %p94
        $region42: #{tpu_custom_call.1} parent=31 // pred_check_branch
          %278 = sbr.rel (%p276) target = $region44
        $region43: #{tpu_custom_call.1} parent=31 // pred_region
          %s279 = sand.u32 %s22, 1
          %s280 = scalar_lea.sflag [#allocation7], %s279
          %s281 = sand.u32 %s84, 1
          %s282 = smul.addr %s281, 8
          %s283 = scalar_lea.vmem [#allocation6], %s282
          %s285 = ssub.s32 128, 128
          %286 = vsyncadd %s280, %s285
          %s287 = smul.addr %s22, 128
          %s288 = scalar_lea.hbm %s2, %s287
          %s290 = sshll.u32 %s283, 4
          %s291 = int_to_ptr.vmem [resolvable:$true] %s290
          %293 = dma.hbm_to_vmem [thread:$0]  %s288, 128, %s291, %s280
        $region44: #{tpu_custom_call.1} parent=31 // pred_fallthru
          _
      $region32: #{tpu_custom_call.1} parent=5 // pred_fallthru
        _
      %p294 = scmp.le.s32.totalorder 1, %s22
      %p295 = scmp.lt.s32.totalorder %s22, 3
      %p296 = pnand %p294, %p295
      %p297 = pneg %p296
      // Predicated region
      $region45: #{tpu_custom_call.1} parent=5 // pred_check
        _
      $region46: #{tpu_custom_call.1} parent=5 // pred_check_branch
        %299 = sbr.rel (%p296) target = $region48
      $region47: #{tpu_custom_call.1} parent=5 // pred_region
        %s300 = ssub.s32 %s22, 1
        %s301 = sand.u32 %s61, 1
        %s302 = scalar_lea.sflag [#allocation4], %s301
        %s303 = sand.u32 %s61, 1
        %s304 = smul.addr %s303, 8
        %s305 = scalar_lea.vmem [#allocation3], %s304
        // Predicated region
        $region49: #{tpu_custom_call.1} parent=47 // pred_check
          %p306 = pneg %p74
        $region50: #{tpu_custom_call.1} parent=47 // pred_check_branch
          %308 = sbr.rel (%p306) target = $region52
        $region51: #{tpu_custom_call.1} parent=47 // pred_region
          %309 = dma.done %s302, 128
        $region52: #{tpu_custom_call.1} parent=47 // pred_fallthru
          _
        %s310 = sand.u32 %s27, 1
        %s311 = scalar_lea.sflag [#allocation7], %s310
        %s312 = sand.u32 %s87, 1
        %s313 = smul.addr %s312, 8
        %s314 = scalar_lea.vmem [#allocation6], %s313
        // Predicated region
        $region53: #{tpu_custom_call.1} parent=47 // pred_check
          %p315 = pneg %p100
        $region54: #{tpu_custom_call.1} parent=47 // pred_check_branch
          %317 = sbr.rel (%p315) target = $region56
        $region55: #{tpu_custom_call.1} parent=47 // pred_region
          %318 = dma.done %s311, 128
        $region56: #{tpu_custom_call.1} parent=47 // pred_fallthru
          _
        // Predicated region
        $region57: #{tpu_custom_call.1} parent=47 // pred_check
          %p319 = pneg %p121
        $region58: #{tpu_custom_call.1} parent=47 // pred_check_branch
          %321 = sbr.rel (%p319) target = $region60
        $region59: #{tpu_custom_call.1} parent=47 // pred_region
          %322 = dma.done [#allocation7], 1536
        $region60: #{tpu_custom_call.1} parent=47 // pred_fallthru
          _
        %p323 = scmp.lt.s32.totalorder %s27, 1
        %s324 = scalar_select %p323, %s27, 1
        %s325 = smul.addr %s324, 8
        %s326 = scalar_lea.vmem %s0, %s325
        %p327 = pneg %p48
        %p328 = pneg %p45
        %s329 = sand.u32 %s61, 1
        %s330 = scalar_lea.sflag [#allocation4], %s329
        %s331 = sand.u32 %s61, 1
        %s332 = smul.addr %s331, 8
        %s333 = scalar_lea.vmem [#allocation3], %s332
        %p334 = pneg %p74
        %p335 = pneg %p71
        %s336 = sand.u32 %s27, 1
        %s337 = scalar_lea.sflag [#allocation7], %s336
        %s338 = sand.u32 %s87, 1
        %s339 = smul.addr %s338, 8
        %s340 = scalar_lea.vmem [#allocation6], %s339
        %p341 = pneg %p100
        %p342 = pneg %p97
        %p343 = pneg %p121
        %p344 = pneg %p118
        %p345 = pneg %p142
        %p346 = pneg %p139
        %p347 = pneg %p163
        %p348 = pneg %p160
        %p349 = pneg %p184
        %p350 = pneg %p181
        %p351 = pneg %p210
        %p352 = pneg %p207
        %s353 = sand.u32 %s197, 1
        %s354 = scalar_lea.sflag [#allocation5], %s353
        %s355 = sand.u32 %s197, 1
        %s356 = smul.addr %s355, 8
        %s357 = scalar_lea.vmem [#allocation9], %s356
        %p358 = scmp.lt.s32.totalorder %s27, 1
        %s359 = scalar_select %p358, %s27, 1
        %s360 = smul.addr %s359, 8
        %s361 = scalar_lea.vmem %s0, %s360
        %v362 = vld [vmem:[#allocation8] sm:$0xff]
        %v363 = vld [vmem:[#allocation8 + $0x8] sm:$0xff]
        %v364 = vld [vmem:[#allocation8 + $0x10] sm:$0xff]
        %v365 = vld [vmem:[#allocation8 + $0x18] sm:$0xff]
        %v366 = vld [vmem:[#allocation8 + $0x20] sm:$0xff]
        %v367 = vld [vmem:[#allocation8 + $0x28] sm:$0xff]
        %v368 = vld [vmem:[#allocation8 + $0x30] sm:$0xff]
        %v369 = vld [vmem:[#allocation8 + $0x38] sm:$0xff]
        %v370 = vld [vmem:[#allocation8 + $0x40] sm:$0xff]
        %v371 = vld [vmem:[#allocation8 + $0x48] sm:$0xff]
        %v372 = vld [vmem:[#allocation8 + $0x50] sm:$0xff]
        %v373 = vld [vmem:[#allocation8 + $0x58] sm:$0xff]
        %v374 = vld [vmem:[%s4] sm:$0x1]
        %v375 = vld [vmem:[%s4 + $0x1] sm:$0x1]
        %v376 = vld [vmem:[%s4 + $0x2] sm:$0x1]
        %v377 = vld [vmem:[%s4 + $0x3] sm:$0x1]
        %v378 = vld [vmem:[%s4 + $0x4] sm:$0x1]
        %v379 = vld [vmem:[%s4 + $0x5] sm:$0x1]
        %v380 = vld [vmem:[%s4 + $0x6] sm:$0x1]
        %v381 = vld [vmem:[%s4 + $0x7] sm:$0x1]
        %v382 = vld [vmem:[%s4 + $0x8] sm:$0x1]
        %v383 = vld [vmem:[%s4 + $0x9] sm:$0x1]
        %v384 = vld [vmem:[%s4 + $0xa] sm:$0x1]
        %v385 = vld [vmem:[%s4 + $0xb] sm:$0x1]
        %v386 = vld [vmem:[%s5] sm:$0x1]
        %v387 = vld [vmem:[%s6] sm:$0x1]
        %v388 = vld [vmem:[%s361] sm:$0xff]
        %v389 = vld [vmem:[%s305] sm:$0xff]
        %v390 = vld [vmem:[%s314] sm:$0xff]
        %v403 = vlaneseq
        %v404 = vshrl.u32 %v403, 7
        %v405 = vsub.s32 0, %v404
        %v406 = vrot.slane %v374, %v405
        %v407 = vlaneseq
        %v408 = vshrl.u32 %v407, 7
        %v409 = vsub.s32 0, %v408
        %v410 = vrot.slane %v375, %v409
        %v411 = vlaneseq
        %v412 = vshrl.u32 %v411, 7
        %v413 = vsub.s32 0, %v412
        %v414 = vrot.slane %v376, %v413
        %v415 = vlaneseq
        %v416 = vshrl.u32 %v415, 7
        %v417 = vsub.s32 0, %v416
        %v418 = vrot.slane %v377, %v417
        %v419 = vlaneseq
        %v420 = vshrl.u32 %v419, 7
        %v421 = vsub.s32 0, %v420
        %v422 = vrot.slane %v378, %v421
        %v423 = vlaneseq
        %v424 = vshrl.u32 %v423, 7
        %v425 = vsub.s32 0, %v424
        %v426 = vrot.slane %v379, %v425
        %v427 = vlaneseq
        %v428 = vshrl.u32 %v427, 7
        %v429 = vsub.s32 0, %v428
        %v430 = vrot.slane %v380, %v429
        %v431 = vlaneseq
        %v432 = vshrl.u32 %v431, 7
        %v433 = vsub.s32 0, %v432
        %v434 = vrot.slane %v381, %v433
        %v435 = vlaneseq
        %v436 = vshrl.u32 %v435, 7
        %v437 = vsub.s32 0, %v436
        %v438 = vrot.slane %v382, %v437
        %v439 = vlaneseq
        %v440 = vshrl.u32 %v439, 7
        %v441 = vsub.s32 0, %v440
        %v442 = vrot.slane %v383, %v441
        %v443 = vlaneseq
        %v444 = vshrl.u32 %v443, 7
        %v445 = vsub.s32 0, %v444
        %v446 = vrot.slane %v384, %v445
        %v447 = vlaneseq
        %v448 = vshrl.u32 %v447, 7
        %v449 = vsub.s32 0, %v448
        %v450 = vrot.slane %v385, %v449
        %vm463 = vcmask 261120
        %v465 = vsel %vm463, %v388, 0
        %v468 = vsel %vm463, %v362, 0
        %470 = vmatprep.subr.mxu0 0.0
        %471 = vmatpush1.xpose.msra.mxu0 0.0
        %472 = vmatprep.subr.mxu0 0.0
        %473 = vmatpush1.xpose.msra.mxu0 0.0
        %474 = vmatprep.subr.mxu0 0.0
        %475 = vmatpush1.xpose.msra.mxu0 0.0
        %476 = vmatprep.subr.mxu0 0.0
        %477 = vmatpush1.xpose.msra.mxu0 0.0
        %478 = vmatprep.subr.mxu0 0.0
        %479 = vmatpush1.xpose.msra.mxu0 0.0
        %480 = vmatprep.subr.mxu0 0.0
        %481 = vmatpush1.xpose.msra.mxu0 0.0
        %482 = vmatprep.subr.mxu0 0.0
        %483 = vmatpush1.xpose.msra.mxu0 0.0
        %484 = vmatprep.subr.mxu0 0.0
        %485 = vmatpush1.xpose.msra.mxu0 0.0
        %486 = vmatprep.subr.mxu0 0.0
        %487 = vmatpush1.xpose.msra.mxu0 0.0
        %488 = vmatprep.subr.mxu0 0.0
        %489 = vmatpush1.xpose.msra.mxu0 0.0
        %490 = vmatprep.subr.mxu0 0.0
        %491 = vmatpush1.xpose.msra.mxu0 0.0
        %492 = vmatprep.subr.mxu0 0.0
        %493 = vmatpush1.xpose.msra.mxu0 0.0
        %494 = vmatprep.subr.mxu0 0.0
        %495 = vmatpush1.xpose.msra.mxu0 0.0
        %496 = vmatprep.subr.mxu0 0.0
        %497 = vmatpush1.xpose.msra.mxu0 0.0
        %498 = vmatprep.subr.mxu0 0.0
        %499 = vmatpush1.xpose.msra.mxu0 0.0
        %500 = vmatprep.subr.mxu0 0.0
        %501 = vmatpush1.xpose.msra.mxu0 %v468
        %502 = vmatprep.subr.mxu0 0.0
        %503 = vmatpush2.xpose.msra.mxu0 0.0
        %504 = vmatprep.subr.mxu0 0.0
        %505 = vmatpush2.xpose.msra.mxu0 0.0
        %506 = vmatprep.subr.mxu0 0.0
        %507 = vmatpush2.xpose.msra.mxu0 0.0
        %508 = vmatprep.subr.mxu0 0.0
        %509 = vmatpush2.xpose.msra.mxu0 0.0
        %510 = vmatprep.subr.mxu0 0.0
        %511 = vmatpush2.xpose.msra.mxu0 0.0
        %512 = vmatprep.subr.mxu0 0.0
        %513 = vmatpush2.xpose.msra.mxu0 0.0
        %514 = vmatprep.subr.mxu0 0.0
        %515 = vmatpush2.xpose.msra.mxu0 0.0
        %516 = vmatprep.subr.mxu0 0.0
        %517 = vmatpush2.xpose.msra.mxu0 0.0
        %518 = vmatprep.subr.mxu0 0.0
        %519 = vmatpush2.xpose.msra.mxu0 0.0
        %520 = vmatprep.subr.mxu0 0.0
        %521 = vmatpush2.xpose.msra.mxu0 0.0
        %522 = vmatprep.subr.mxu0 0.0
        %523 = vmatpush2.xpose.msra.mxu0 0.0
        %524 = vmatprep.subr.mxu0 0.0
        %525 = vmatpush2.xpose.msra.mxu0 0.0
        %526 = vmatprep.subr.mxu0 0.0
        %527 = vmatpush2.xpose.msra.mxu0 0.0
        %528 = vmatprep.subr.mxu0 0.0
        %529 = vmatpush2.xpose.msra.mxu0 0.0
        %530 = vmatprep.subr.mxu0 0.0
        %531 = vmatpush2.xpose.msra.mxu0 0.0
        %532 = vmatprep.subr.mxu0 0.0
        %533 = vmatpush2.xpose.msra.mxu0 0.0
        %534 = vmatprep.mubr.f32.mxu0 0.0
        %535 = vmatmul.mubr.f32.gmra.mxu0 %v465
        %v536 = vpop.f32.mrf.mxu0
        %v537 = vadd.f32 %v406, %v536
        %v538 = vpop.f32.mrf.mxu0
        %539 = vdwg.mxu0
        %v541 = vsel %vm463, %v363, 0
        %543 = vmatprep.subr.mxu0 0.0
        %544 = vmatpush1.xpose.msra.mxu0 0.0
        %545 = vmatprep.subr.mxu0 0.0
        %546 = vmatpush1.xpose.msra.mxu0 0.0
        %547 = vmatprep.subr.mxu0 0.0
        %548 = vmatpush1.xpose.msra.mxu0 0.0
        %549 = vmatprep.subr.mxu0 0.0
        %550 = vmatpush1.xpose.msra.mxu0 0.0
        %551 = vmatprep.subr.mxu0 0.0
        %552 = vmatpush1.xpose.msra.mxu0 0.0
        %553 = vmatprep.subr.mxu0 0.0
        %554 = vmatpush1.xpose.msra.mxu0 0.0
        %555 = vmatprep.subr.mxu0 0.0
        %556 = vmatpush1.xpose.msra.mxu0 0.0
        %557 = vmatprep.subr.mxu0 0.0
        %558 = vmatpush1.xpose.msra.mxu0 0.0
        %559 = vmatprep.subr.mxu0 0.0
        %560 = vmatpush1.xpose.msra.mxu0 0.0
        %561 = vmatprep.subr.mxu0 0.0
        %562 = vmatpush1.xpose.msra.mxu0 0.0
        %563 = vmatprep.subr.mxu0 0.0
        %564 = vmatpush1.xpose.msra.mxu0 0.0
        %565 = vmatprep.subr.mxu0 0.0
        %566 = vmatpush1.xpose.msra.mxu0 0.0
        %567 = vmatprep.subr.mxu0 0.0
        %568 = vmatpush1.xpose.msra.mxu0 0.0
        %569 = vmatprep.subr.mxu0 0.0
        %570 = vmatpush1.xpose.msra.mxu0 0.0
        %571 = vmatprep.subr.mxu0 0.0
        %572 = vmatpush1.xpose.msra.mxu0 0.0
        %573 = vmatprep.subr.mxu0 0.0
        %574 = vmatpush1.xpose.msra.mxu0 %v541
        %575 = vmatprep.subr.mxu0 0.0
        %576 = vmatpush2.xpose.msra.mxu0 0.0
        %577 = vmatprep.subr.mxu0 0.0
        %578 = vmatpush2.xpose.msra.mxu0 0.0
        %579 = vmatprep.subr.mxu0 0.0
        %580 = vmatpush2.xpose.msra.mxu0 0.0
        %581 = vmatprep.subr.mxu0 0.0
        %582 = vmatpush2.xpose.msra.mxu0 0.0
        %583 = vmatprep.subr.mxu0 0.0
        %584 = vmatpush2.xpose.msra.mxu0 0.0
        %585 = vmatprep.subr.mxu0 0.0
        %586 = vmatpush2.xpose.msra.mxu0 0.0
        %587 = vmatprep.subr.mxu0 0.0
        %588 = vmatpush2.xpose.msra.mxu0 0.0
        %589 = vmatprep.subr.mxu0 0.0
        %590 = vmatpush2.xpose.msra.mxu0 0.0
        %591 = vmatprep.subr.mxu0 0.0
        %592 = vmatpush2.xpose.msra.mxu0 0.0
        %593 = vmatprep.subr.mxu0 0.0
        %594 = vmatpush2.xpose.msra.mxu0 0.0
        %595 = vmatprep.subr.mxu0 0.0
        %596 = vmatpush2.xpose.msra.mxu0 0.0
        %597 = vmatprep.subr.mxu0 0.0
        %598 = vmatpush2.xpose.msra.mxu0 0.0
        %599 = vmatprep.subr.mxu0 0.0
        %600 = vmatpush2.xpose.msra.mxu0 0.0
        %601 = vmatprep.subr.mxu0 0.0
        %602 = vmatpush2.xpose.msra.mxu0 0.0
        %603 = vmatprep.subr.mxu0 0.0
        %604 = vmatpush2.xpose.msra.mxu0 0.0
        %605 = vmatprep.subr.mxu0 0.0
        %606 = vmatpush2.xpose.msra.mxu0 0.0
        %607 = vmatprep.mubr.f32.mxu0 0.0
        %608 = vmatmul.mubr.f32.gmra.mxu0 %v465
        %v609 = vpop.f32.mrf.mxu0
        %v610 = vadd.f32 %v410, %v609
        %v611 = vpop.f32.mrf.mxu0
        %612 = vdwg.mxu0
        %v614 = vsel %vm463, %v364, 0
        %616 = vmatprep.subr.mxu0 0.0
        %617 = vmatpush1.xpose.msra.mxu0 0.0
        %618 = vmatprep.subr.mxu0 0.0
        %619 = vmatpush1.xpose.msra.mxu0 0.0
        %620 = vmatprep.subr.mxu0 0.0
        %621 = vmatpush1.xpose.msra.mxu0 0.0
        %622 = vmatprep.subr.mxu0 0.0
        %623 = vmatpush1.xpose.msra.mxu0 0.0
        %624 = vmatprep.subr.mxu0 0.0
        %625 = vmatpush1.xpose.msra.mxu0 0.0
        %626 = vmatprep.subr.mxu0 0.0
        %627 = vmatpush1.xpose.msra.mxu0 0.0
        %628 = vmatprep.subr.mxu0 0.0
        %629 = vmatpush1.xpose.msra.mxu0 0.0
        %630 = vmatprep.subr.mxu0 0.0
        %631 = vmatpush1.xpose.msra.mxu0 0.0
        %632 = vmatprep.subr.mxu0 0.0
        %633 = vmatpush1.xpose.msra.mxu0 0.0
        %634 = vmatprep.subr.mxu0 0.0
        %635 = vmatpush1.xpose.msra.mxu0 0.0
        %636 = vmatprep.subr.mxu0 0.0
        %637 = vmatpush1.xpose.msra.mxu0 0.0
        %638 = vmatprep.subr.mxu0 0.0
        %639 = vmatpush1.xpose.msra.mxu0 0.0
        %640 = vmatprep.subr.mxu0 0.0
        %641 = vmatpush1.xpose.msra.mxu0 0.0
        %642 = vmatprep.subr.mxu0 0.0
        %643 = vmatpush1.xpose.msra.mxu0 0.0
        %644 = vmatprep.subr.mxu0 0.0
        %645 = vmatpush1.xpose.msra.mxu0 0.0
        %646 = vmatprep.subr.mxu0 0.0
        %647 = vmatpush1.xpose.msra.mxu0 %v614
        %648 = vmatprep.subr.mxu0 0.0
        %649 = vmatpush2.xpose.msra.mxu0 0.0
        %650 = vmatprep.subr.mxu0 0.0
        %651 = vmatpush2.xpose.msra.mxu0 0.0
        %652 = vmatprep.subr.mxu0 0.0
        %653 = vmatpush2.xpose.msra.mxu0 0.0
        %654 = vmatprep.subr.mxu0 0.0
        %655 = vmatpush2.xpose.msra.mxu0 0.0
        %656 = vmatprep.subr.mxu0 0.0
        %657 = vmatpush2.xpose.msra.mxu0 0.0
        %658 = vmatprep.subr.mxu0 0.0
        %659 = vmatpush2.xpose.msra.mxu0 0.0
        %660 = vmatprep.subr.mxu0 0.0
        %661 = vmatpush2.xpose.msra.mxu0 0.0
        %662 = vmatprep.subr.mxu0 0.0
        %663 = vmatpush2.xpose.msra.mxu0 0.0
        %664 = vmatprep.subr.mxu0 0.0
        %665 = vmatpush2.xpose.msra.mxu0 0.0
        %666 = vmatprep.subr.mxu0 0.0
        %667 = vmatpush2.xpose.msra.mxu0 0.0
        %668 = vmatprep.subr.mxu0 0.0
        %669 = vmatpush2.xpose.msra.mxu0 0.0
        %670 = vmatprep.subr.mxu0 0.0
        %671 = vmatpush2.xpose.msra.mxu0 0.0
        %672 = vmatprep.subr.mxu0 0.0
        %673 = vmatpush2.xpose.msra.mxu0 0.0
        %674 = vmatprep.subr.mxu0 0.0
        %675 = vmatpush2.xpose.msra.mxu0 0.0
        %676 = vmatprep.subr.mxu0 0.0
        %677 = vmatpush2.xpose.msra.mxu0 0.0
        %678 = vmatprep.subr.mxu0 0.0
        %679 = vmatpush2.xpose.msra.mxu0 0.0
        %680 = vmatprep.mubr.f32.mxu0 0.0
        %681 = vmatmul.mubr.f32.gmra.mxu0 %v465
        %v682 = vpop.f32.mrf.mxu0
        %v683 = vadd.f32 %v414, %v682
        %v684 = vpop.f32.mrf.mxu0
        %685 = vdwg.mxu0
        %v687 = vsel %vm463, %v365, 0
        %689 = vmatprep.subr.mxu0 0.0
        %690 = vmatpush1.xpose.msra.mxu0 0.0
        %691 = vmatprep.subr.mxu0 0.0
        %692 = vmatpush1.xpose.msra.mxu0 0.0
        %693 = vmatprep.subr.mxu0 0.0
        %694 = vmatpush1.xpose.msra.mxu0 0.0
        %695 = vmatprep.subr.mxu0 0.0
        %696 = vmatpush1.xpose.msra.mxu0 0.0
        %697 = vmatprep.subr.mxu0 0.0
        %698 = vmatpush1.xpose.msra.mxu0 0.0
        %699 = vmatprep.subr.mxu0 0.0
        %700 = vmatpush1.xpose.msra.mxu0 0.0
        %701 = vmatprep.subr.mxu0 0.0
        %702 = vmatpush1.xpose.msra.mxu0 0.0
        %703 = vmatprep.subr.mxu0 0.0
        %704 = vmatpush1.xpose.msra.mxu0 0.0
        %705 = vmatprep.subr.mxu0 0.0
        %706 = vmatpush1.xpose.msra.mxu0 0.0
        %707 = vmatprep.subr.mxu0 0.0
        %708 = vmatpush1.xpose.msra.mxu0 0.0
        %709 = vmatprep.subr.mxu0 0.0
        %710 = vmatpush1.xpose.msra.mxu0 0.0
        %711 = vmatprep.subr.mxu0 0.0
        %712 = vmatpush1.xpose.msra.mxu0 0.0
        %713 = vmatprep.subr.mxu0 0.0
        %714 = vmatpush1.xpose.msra.mxu0 0.0
        %715 = vmatprep.subr.mxu0 0.0
        %716 = vmatpush1.xpose.msra.mxu0 0.0
        %717 = vmatprep.subr.mxu0 0.0
        %718 = vmatpush1.xpose.msra.mxu0 0.0
        %719 = vmatprep.subr.mxu0 0.0
        %720 = vmatpush1.xpose.msra.mxu0 %v687
        %721 = vmatprep.subr.mxu0 0.0
        %722 = vmatpush2.xpose.msra.mxu0 0.0
        %723 = vmatprep.subr.mxu0 0.0
        %724 = vmatpush2.xpose.msra.mxu0 0.0
        %725 = vmatprep.subr.mxu0 0.0
        %726 = vmatpush2.xpose.msra.mxu0 0.0
        %727 = vmatprep.subr.mxu0 0.0
        %728 = vmatpush2.xpose.msra.mxu0 0.0
        %729 = vmatprep.subr.mxu0 0.0
        %730 = vmatpush2.xpose.msra.mxu0 0.0
        %731 = vmatprep.subr.mxu0 0.0
        %732 = vmatpush2.xpose.msra.mxu0 0.0
        %733 = vmatprep.subr.mxu0 0.0
        %734 = vmatpush2.xpose.msra.mxu0 0.0
        %735 = vmatprep.subr.mxu0 0.0
        %736 = vmatpush2.xpose.msra.mxu0 0.0
        %737 = vmatprep.subr.mxu0 0.0
        %738 = vmatpush2.xpose.msra.mxu0 0.0
        %739 = vmatprep.subr.mxu0 0.0
        %740 = vmatpush2.xpose.msra.mxu0 0.0
        %741 = vmatprep.subr.mxu0 0.0
        %742 = vmatpush2.xpose.msra.mxu0 0.0
        %743 = vmatprep.subr.mxu0 0.0
        %744 = vmatpush2.xpose.msra.mxu0 0.0
        %745 = vmatprep.subr.mxu0 0.0
        %746 = vmatpush2.xpose.msra.mxu0 0.0
        %747 = vmatprep.subr.mxu0 0.0
        %748 = vmatpush2.xpose.msra.mxu0 0.0
        %749 = vmatprep.subr.mxu0 0.0
        %750 = vmatpush2.xpose.msra.mxu0 0.0
        %751 = vmatprep.subr.mxu0 0.0
        %752 = vmatpush2.xpose.msra.mxu0 0.0
        %753 = vmatprep.mubr.f32.mxu0 0.0
        %754 = vmatmul.mubr.f32.gmra.mxu0 %v465
        %v755 = vpop.f32.mrf.mxu0
        %v756 = vadd.f32 %v418, %v755
        %v757 = vpop.f32.mrf.mxu0
        %758 = vdwg.mxu0
        %v760 = vsel %vm463, %v389, 0
        %v763 = vsel %vm463, %v366, 0
        %765 = vmatprep.subr.mxu0 0.0
        %766 = vmatpush1.xpose.msra.mxu0 0.0
        %767 = vmatprep.subr.mxu0 0.0
        %768 = vmatpush1.xpose.msra.mxu0 0.0
        %769 = vmatprep.subr.mxu0 0.0
        %770 = vmatpush1.xpose.msra.mxu0 0.0
        %771 = vmatprep.subr.mxu0 0.0
        %772 = vmatpush1.xpose.msra.mxu0 0.0
        %773 = vmatprep.subr.mxu0 0.0
        %774 = vmatpush1.xpose.msra.mxu0 0.0
        %775 = vmatprep.subr.mxu0 0.0
        %776 = vmatpush1.xpose.msra.mxu0 0.0
        %777 = vmatprep.subr.mxu0 0.0
        %778 = vmatpush1.xpose.msra.mxu0 0.0
        %779 = vmatprep.subr.mxu0 0.0
        %780 = vmatpush1.xpose.msra.mxu0 0.0
        %781 = vmatprep.subr.mxu0 0.0
        %782 = vmatpush1.xpose.msra.mxu0 0.0
        %783 = vmatprep.subr.mxu0 0.0
        %784 = vmatpush1.xpose.msra.mxu0 0.0
        %785 = vmatprep.subr.mxu0 0.0
        %786 = vmatpush1.xpose.msra.mxu0 0.0
        %787 = vmatprep.subr.mxu0 0.0
        %788 = vmatpush1.xpose.msra.mxu0 0.0
        %789 = vmatprep.subr.mxu0 0.0
        %790 = vmatpush1.xpose.msra.mxu0 0.0
        %791 = vmatprep.subr.mxu0 0.0
        %792 = vmatpush1.xpose.msra.mxu0 0.0
        %793 = vmatprep.subr.mxu0 0.0
        %794 = vmatpush1.xpose.msra.mxu0 0.0
        %795 = vmatprep.subr.mxu0 0.0
        %796 = vmatpush1.xpose.msra.mxu0 %v763
        %797 = vmatprep.subr.mxu0 0.0
        %798 = vmatpush2.xpose.msra.mxu0 0.0
        %799 = vmatprep.subr.mxu0 0.0
        %800 = vmatpush2.xpose.msra.mxu0 0.0
        %801 = vmatprep.subr.mxu0 0.0
        %802 = vmatpush2.xpose.msra.mxu0 0.0
        %803 = vmatprep.subr.mxu0 0.0
        %804 = vmatpush2.xpose.msra.mxu0 0.0
        %805 = vmatprep.subr.mxu0 0.0
        %806 = vmatpush2.xpose.msra.mxu0 0.0
        %807 = vmatprep.subr.mxu0 0.0
        %808 = vmatpush2.xpose.msra.mxu0 0.0
        %809 = vmatprep.subr.mxu0 0.0
        %810 = vmatpush2.xpose.msra.mxu0 0.0
        %811 = vmatprep.subr.mxu0 0.0
        %812 = vmatpush2.xpose.msra.mxu0 0.0
        %813 = vmatprep.subr.mxu0 0.0
        %814 = vmatpush2.xpose.msra.mxu0 0.0
        %815 = vmatprep.subr.mxu0 0.0
        %816 = vmatpush2.xpose.msra.mxu0 0.0
        %817 = vmatprep.subr.mxu0 0.0
        %818 = vmatpush2.xpose.msra.mxu0 0.0
        %819 = vmatprep.subr.mxu0 0.0
        %820 = vmatpush2.xpose.msra.mxu0 0.0
        %821 = vmatprep.subr.mxu0 0.0
        %822 = vmatpush2.xpose.msra.mxu0 0.0
        %823 = vmatprep.subr.mxu0 0.0
        %824 = vmatpush2.xpose.msra.mxu0 0.0
        %825 = vmatprep.subr.mxu0 0.0
        %826 = vmatpush2.xpose.msra.mxu0 0.0
        %827 = vmatprep.subr.mxu0 0.0
        %828 = vmatpush2.xpose.msra.mxu0 0.0
        %829 = vmatprep.mubr.f32.mxu0 0.0
        %830 = vmatmul.mubr.f32.gmra.mxu0 %v760
        %v831 = vpop.f32.mrf.mxu0
        %v832 = vadd.f32 %v422, %v831
        %v833 = vpop.f32.mrf.mxu0
        %834 = vdwg.mxu0
        %v836 = vsel %vm463, %v367, 0
        %838 = vmatprep.subr.mxu0 0.0
        %839 = vmatpush1.xpose.msra.mxu0 0.0
        %840 = vmatprep.subr.mxu0 0.0
        %841 = vmatpush1.xpose.msra.mxu0 0.0
        %842 = vmatprep.subr.mxu0 0.0
        %843 = vmatpush1.xpose.msra.mxu0 0.0
        %844 = vmatprep.subr.mxu0 0.0
        %845 = vmatpush1.xpose.msra.mxu0 0.0
        %846 = vmatprep.subr.mxu0 0.0
        %847 = vmatpush1.xpose.msra.mxu0 0.0
        %848 = vmatprep.subr.mxu0 0.0
        %849 = vmatpush1.xpose.msra.mxu0 0.0
        %850 = vmatprep.subr.mxu0 0.0
        %851 = vmatpush1.xpose.msra.mxu0 0.0
        %852 = vmatprep.subr.mxu0 0.0
        %853 = vmatpush1.xpose.msra.mxu0 0.0
        %854 = vmatprep.subr.mxu0 0.0
        %855 = vmatpush1.xpose.msra.mxu0 0.0
        %856 = vmatprep.subr.mxu0 0.0
        %857 = vmatpush1.xpose.msra.mxu0 0.0
        %858 = vmatprep.subr.mxu0 0.0
        %859 = vmatpush1.xpose.msra.mxu0 0.0
        %860 = vmatprep.subr.mxu0 0.0
        %861 = vmatpush1.xpose.msra.mxu0 0.0
        %862 = vmatprep.subr.mxu0 0.0
        %863 = vmatpush1.xpose.msra.mxu0 0.0
        %864 = vmatprep.subr.mxu0 0.0
        %865 = vmatpush1.xpose.msra.mxu0 0.0
        %866 = vmatprep.subr.mxu0 0.0
        %867 = vmatpush1.xpose.msra.mxu0 0.0
        %868 = vmatprep.subr.mxu0 0.0
        %869 = vmatpush1.xpose.msra.mxu0 %v836
        %870 = vmatprep.subr.mxu0 0.0
        %871 = vmatpush2.xpose.msra.mxu0 0.0
        %872 = vmatprep.subr.mxu0 0.0
        %873 = vmatpush2.xpose.msra.mxu0 0.0
        %874 = vmatprep.subr.mxu0 0.0
        %875 = vmatpush2.xpose.msra.mxu0 0.0
        %876 = vmatprep.subr.mxu0 0.0
        %877 = vmatpush2.xpose.msra.mxu0 0.0
        %878 = vmatprep.subr.mxu0 0.0
        %879 = vmatpush2.xpose.msra.mxu0 0.0
        %880 = vmatprep.subr.mxu0 0.0
        %881 = vmatpush2.xpose.msra.mxu0 0.0
        %882 = vmatprep.subr.mxu0 0.0
        %883 = vmatpush2.xpose.msra.mxu0 0.0
        %884 = vmatprep.subr.mxu0 0.0
        %885 = vmatpush2.xpose.msra.mxu0 0.0
        %886 = vmatprep.subr.mxu0 0.0
        %887 = vmatpush2.xpose.msra.mxu0 0.0
        %888 = vmatprep.subr.mxu0 0.0
        %889 = vmatpush2.xpose.msra.mxu0 0.0
        %890 = vmatprep.subr.mxu0 0.0
        %891 = vmatpush2.xpose.msra.mxu0 0.0
        %892 = vmatprep.subr.mxu0 0.0
        %893 = vmatpush2.xpose.msra.mxu0 0.0
        %894 = vmatprep.subr.mxu0 0.0
        %895 = vmatpush2.xpose.msra.mxu0 0.0
        %896 = vmatprep.subr.mxu0 0.0
        %897 = vmatpush2.xpose.msra.mxu0 0.0
        %898 = vmatprep.subr.mxu0 0.0
        %899 = vmatpush2.xpose.msra.mxu0 0.0
        %900 = vmatprep.subr.mxu0 0.0
        %901 = vmatpush2.xpose.msra.mxu0 0.0
        %902 = vmatprep.mubr.f32.mxu0 0.0
        %903 = vmatmul.mubr.f32.gmra.mxu0 %v760
        %v904 = vpop.f32.mrf.mxu0
        %v905 = vadd.f32 %v426, %v904
        %v906 = vpop.f32.mrf.mxu0
        %907 = vdwg.mxu0
        %v909 = vsel %vm463, %v368, 0
        %911 = vmatprep.subr.mxu0 0.0
        %912 = vmatpush1.xpose.msra.mxu0 0.0
        %913 = vmatprep.subr.mxu0 0.0
        %914 = vmatpush1.xpose.msra.mxu0 0.0
        %915 = vmatprep.subr.mxu0 0.0
        %916 = vmatpush1.xpose.msra.mxu0 0.0
        %917 = vmatprep.subr.mxu0 0.0
        %918 = vmatpush1.xpose.msra.mxu0 0.0
        %919 = vmatprep.subr.mxu0 0.0
        %920 = vmatpush1.xpose.msra.mxu0 0.0
        %921 = vmatprep.subr.mxu0 0.0
        %922 = vmatpush1.xpose.msra.mxu0 0.0
        %923 = vmatprep.subr.mxu0 0.0
        %924 = vmatpush1.xpose.msra.mxu0 0.0
        %925 = vmatprep.subr.mxu0 0.0
        %926 = vmatpush1.xpose.msra.mxu0 0.0
        %927 = vmatprep.subr.mxu0 0.0
        %928 = vmatpush1.xpose.msra.mxu0 0.0
        %929 = vmatprep.subr.mxu0 0.0
        %930 = vmatpush1.xpose.msra.mxu0 0.0
        %931 = vmatprep.subr.mxu0 0.0
        %932 = vmatpush1.xpose.msra.mxu0 0.0
        %933 = vmatprep.subr.mxu0 0.0
        %934 = vmatpush1.xpose.msra.mxu0 0.0
        %935 = vmatprep.subr.mxu0 0.0
        %936 = vmatpush1.xpose.msra.mxu0 0.0
        %937 = vmatprep.subr.mxu0 0.0
        %938 = vmatpush1.xpose.msra.mxu0 0.0
        %939 = vmatprep.subr.mxu0 0.0
        %940 = vmatpush1.xpose.msra.mxu0 0.0
        %941 = vmatprep.subr.mxu0 0.0
        %942 = vmatpush1.xpose.msra.mxu0 %v909
        %943 = vmatprep.subr.mxu0 0.0
        %944 = vmatpush2.xpose.msra.mxu0 0.0
        %945 = vmatprep.subr.mxu0 0.0
        %946 = vmatpush2.xpose.msra.mxu0 0.0
        %947 = vmatprep.subr.mxu0 0.0
        %948 = vmatpush2.xpose.msra.mxu0 0.0
        %949 = vmatprep.subr.mxu0 0.0
        %950 = vmatpush2.xpose.msra.mxu0 0.0
        %951 = vmatprep.subr.mxu0 0.0
        %952 = vmatpush2.xpose.msra.mxu0 0.0
        %953 = vmatprep.subr.mxu0 0.0
        %954 = vmatpush2.xpose.msra.mxu0 0.0
        %955 = vmatprep.subr.mxu0 0.0
        %956 = vmatpush2.xpose.msra.mxu0 0.0
        %957 = vmatprep.subr.mxu0 0.0
        %958 = vmatpush2.xpose.msra.mxu0 0.0
        %959 = vmatprep.subr.mxu0 0.0
        %960 = vmatpush2.xpose.msra.mxu0 0.0
        %961 = vmatprep.subr.mxu0 0.0
        %962 = vmatpush2.xpose.msra.mxu0 0.0
        %963 = vmatprep.subr.mxu0 0.0
        %964 = vmatpush2.xpose.msra.mxu0 0.0
        %965 = vmatprep.subr.mxu0 0.0
        %966 = vmatpush2.xpose.msra.mxu0 0.0
        %967 = vmatprep.subr.mxu0 0.0
        %968 = vmatpush2.xpose.msra.mxu0 0.0
        %969 = vmatprep.subr.mxu0 0.0
        %970 = vmatpush2.xpose.msra.mxu0 0.0
        %971 = vmatprep.subr.mxu0 0.0
        %972 = vmatpush2.xpose.msra.mxu0 0.0
        %973 = vmatprep.subr.mxu0 0.0
        %974 = vmatpush2.xpose.msra.mxu0 0.0
        %975 = vmatprep.mubr.f32.mxu0 0.0
        %976 = vmatmul.mubr.f32.gmra.mxu0 %v760
        %v977 = vpop.f32.mrf.mxu0
        %v978 = vadd.f32 %v430, %v977
        %v979 = vpop.f32.mrf.mxu0
        %980 = vdwg.mxu0
        %v982 = vsel %vm463, %v369, 0
        %984 = vmatprep.subr.mxu0 0.0
        %985 = vmatpush1.xpose.msra.mxu0 0.0
        %986 = vmatprep.subr.mxu0 0.0
        %987 = vmatpush1.xpose.msra.mxu0 0.0
        %988 = vmatprep.subr.mxu0 0.0
        %989 = vmatpush1.xpose.msra.mxu0 0.0
        %990 = vmatprep.subr.mxu0 0.0
        %991 = vmatpush1.xpose.msra.mxu0 0.0
        %992 = vmatprep.subr.mxu0 0.0
        %993 = vmatpush1.xpose.msra.mxu0 0.0
        %994 = vmatprep.subr.mxu0 0.0
        %995 = vmatpush1.xpose.msra.mxu0 0.0
        %996 = vmatprep.subr.mxu0 0.0
        %997 = vmatpush1.xpose.msra.mxu0 0.0
        %998 = vmatprep.subr.mxu0 0.0
        %999 = vmatpush1.xpose.msra.mxu0 0.0
        %1000 = vmatprep.subr.mxu0 0.0
        %1001 = vmatpush1.xpose.msra.mxu0 0.0
        %1002 = vmatprep.subr.mxu0 0.0
        %1003 = vmatpush1.xpose.msra.mxu0 0.0
        %1004 = vmatprep.subr.mxu0 0.0
        %1005 = vmatpush1.xpose.msra.mxu0 0.0
        %1006 = vmatprep.subr.mxu0 0.0
        %1007 = vmatpush1.xpose.msra.mxu0 0.0
        %1008 = vmatprep.subr.mxu0 0.0
        %1009 = vmatpush1.xpose.msra.mxu0 0.0
        %1010 = vmatprep.subr.mxu0 0.0
        %1011 = vmatpush1.xpose.msra.mxu0 0.0
        %1012 = vmatprep.subr.mxu0 0.0
        %1013 = vmatpush1.xpose.msra.mxu0 0.0
        %1014 = vmatprep.subr.mxu0 0.0
        %1015 = vmatpush1.xpose.msra.mxu0 %v982
        %1016 = vmatprep.subr.mxu0 0.0
        %1017 = vmatpush2.xpose.msra.mxu0 0.0
        %1018 = vmatprep.subr.mxu0 0.0
        %1019 = vmatpush2.xpose.msra.mxu0 0.0
        %1020 = vmatprep.subr.mxu0 0.0
        %1021 = vmatpush2.xpose.msra.mxu0 0.0
        %1022 = vmatprep.subr.mxu0 0.0
        %1023 = vmatpush2.xpose.msra.mxu0 0.0
        %1024 = vmatprep.subr.mxu0 0.0
        %1025 = vmatpush2.xpose.msra.mxu0 0.0
        %1026 = vmatprep.subr.mxu0 0.0
        %1027 = vmatpush2.xpose.msra.mxu0 0.0
        %1028 = vmatprep.subr.mxu0 0.0
        %1029 = vmatpush2.xpose.msra.mxu0 0.0
        %1030 = vmatprep.subr.mxu0 0.0
        %1031 = vmatpush2.xpose.msra.mxu0 0.0
        %1032 = vmatprep.subr.mxu0 0.0
        %1033 = vmatpush2.xpose.msra.mxu0 0.0
        %1034 = vmatprep.subr.mxu0 0.0
        %1035 = vmatpush2.xpose.msra.mxu0 0.0
        %1036 = vmatprep.subr.mxu0 0.0
        %1037 = vmatpush2.xpose.msra.mxu0 0.0
        %1038 = vmatprep.subr.mxu0 0.0
        %1039 = vmatpush2.xpose.msra.mxu0 0.0
        %1040 = vmatprep.subr.mxu0 0.0
        %1041 = vmatpush2.xpose.msra.mxu0 0.0
        %1042 = vmatprep.subr.mxu0 0.0
        %1043 = vmatpush2.xpose.msra.mxu0 0.0
        %1044 = vmatprep.subr.mxu0 0.0
        %1045 = vmatpush2.xpose.msra.mxu0 0.0
        %1046 = vmatprep.subr.mxu0 0.0
        %1047 = vmatpush2.xpose.msra.mxu0 0.0
        %1048 = vmatprep.mubr.f32.mxu0 0.0
        %1049 = vmatmul.mubr.f32.gmra.mxu0 %v760
        %v1050 = vpop.f32.mrf.mxu0
        %v1051 = vadd.f32 %v434, %v1050
        %v1052 = vpop.f32.mrf.mxu0
        %1053 = vdwg.mxu0
        %v1055 = vsel %vm463, %v390, 0
        %v1058 = vsel %vm463, %v370, 0
        %1060 = vmatprep.subr.mxu0 0.0
        %1061 = vmatpush1.xpose.msra.mxu0 0.0
        %1062 = vmatprep.subr.mxu0 0.0
        %1063 = vmatpush1.xpose.msra.mxu0 0.0
        %1064 = vmatprep.subr.mxu0 0.0
        %1065 = vmatpush1.xpose.msra.mxu0 0.0
        %1066 = vmatprep.subr.mxu0 0.0
        %1067 = vmatpush1.xpose.msra.mxu0 0.0
        %1068 = vmatprep.subr.mxu0 0.0
        %1069 = vmatpush1.xpose.msra.mxu0 0.0
        %1070 = vmatprep.subr.mxu0 0.0
        %1071 = vmatpush1.xpose.msra.mxu0 0.0
        %1072 = vmatprep.subr.mxu0 0.0
        %1073 = vmatpush1.xpose.msra.mxu0 0.0
        %1074 = vmatprep.subr.mxu0 0.0
        %1075 = vmatpush1.xpose.msra.mxu0 0.0
        %1076 = vmatprep.subr.mxu0 0.0
        %1077 = vmatpush1.xpose.msra.mxu0 0.0
        %1078 = vmatprep.subr.mxu0 0.0
        %1079 = vmatpush1.xpose.msra.mxu0 0.0
        %1080 = vmatprep.subr.mxu0 0.0
        %1081 = vmatpush1.xpose.msra.mxu0 0.0
        %1082 = vmatprep.subr.mxu0 0.0
        %1083 = vmatpush1.xpose.msra.mxu0 0.0
        %1084 = vmatprep.subr.mxu0 0.0
        %1085 = vmatpush1.xpose.msra.mxu0 0.0
        %1086 = vmatprep.subr.mxu0 0.0
        %1087 = vmatpush1.xpose.msra.mxu0 0.0
        %1088 = vmatprep.subr.mxu0 0.0
        %1089 = vmatpush1.xpose.msra.mxu0 0.0
        %1090 = vmatprep.subr.mxu0 0.0
        %1091 = vmatpush1.xpose.msra.mxu0 %v1058
        %1092 = vmatprep.subr.mxu0 0.0
        %1093 = vmatpush2.xpose.msra.mxu0 0.0
        %1094 = vmatprep.subr.mxu0 0.0
        %1095 = vmatpush2.xpose.msra.mxu0 0.0
        %1096 = vmatprep.subr.mxu0 0.0
        %1097 = vmatpush2.xpose.msra.mxu0 0.0
        %1098 = vmatprep.subr.mxu0 0.0
        %1099 = vmatpush2.xpose.msra.mxu0 0.0
        %1100 = vmatprep.subr.mxu0 0.0
        %1101 = vmatpush2.xpose.msra.mxu0 0.0
        %1102 = vmatprep.subr.mxu0 0.0
        %1103 = vmatpush2.xpose.msra.mxu0 0.0
        %1104 = vmatprep.subr.mxu0 0.0
        %1105 = vmatpush2.xpose.msra.mxu0 0.0
        %1106 = vmatprep.subr.mxu0 0.0
        %1107 = vmatpush2.xpose.msra.mxu0 0.0
        %1108 = vmatprep.subr.mxu0 0.0
        %1109 = vmatpush2.xpose.msra.mxu0 0.0
        %1110 = vmatprep.subr.mxu0 0.0
        %1111 = vmatpush2.xpose.msra.mxu0 0.0
        %1112 = vmatprep.subr.mxu0 0.0
        %1113 = vmatpush2.xpose.msra.mxu0 0.0
        %1114 = vmatprep.subr.mxu0 0.0
        %1115 = vmatpush2.xpose.msra.mxu0 0.0
        %1116 = vmatprep.subr.mxu0 0.0
        %1117 = vmatpush2.xpose.msra.mxu0 0.0
        %1118 = vmatprep.subr.mxu0 0.0
        %1119 = vmatpush2.xpose.msra.mxu0 0.0
        %1120 = vmatprep.subr.mxu0 0.0
        %1121 = vmatpush2.xpose.msra.mxu0 0.0
        %1122 = vmatprep.subr.mxu0 0.0
        %1123 = vmatpush2.xpose.msra.mxu0 0.0
        %1124 = vmatprep.mubr.f32.mxu0 0.0
        %1125 = vmatmul.mubr.f32.gmra.mxu0 %v1055
        %v1126 = vpop.f32.mrf.mxu0
        %v1127 = vadd.f32 %v438, %v1126
        %v1128 = vpop.f32.mrf.mxu0
        %1129 = vdwg.mxu0
        %v1131 = vsel %vm463, %v371, 0
        %1133 = vmatprep.subr.mxu0 0.0
        %1134 = vmatpush1.xpose.msra.mxu0 0.0
        %1135 = vmatprep.subr.mxu0 0.0
        %1136 = vmatpush1.xpose.msra.mxu0 0.0
        %1137 = vmatprep.subr.mxu0 0.0
        %1138 = vmatpush1.xpose.msra.mxu0 0.0
        %1139 = vmatprep.subr.mxu0 0.0
        %1140 = vmatpush1.xpose.msra.mxu0 0.0
        %1141 = vmatprep.subr.mxu0 0.0
        %1142 = vmatpush1.xpose.msra.mxu0 0.0
        %1143 = vmatprep.subr.mxu0 0.0
        %1144 = vmatpush1.xpose.msra.mxu0 0.0
        %1145 = vmatprep.subr.mxu0 0.0
        %1146 = vmatpush1.xpose.msra.mxu0 0.0
        %1147 = vmatprep.subr.mxu0 0.0
        %1148 = vmatpush1.xpose.msra.mxu0 0.0
        %1149 = vmatprep.subr.mxu0 0.0
        %1150 = vmatpush1.xpose.msra.mxu0 0.0
        %1151 = vmatprep.subr.mxu0 0.0
        %1152 = vmatpush1.xpose.msra.mxu0 0.0
        %1153 = vmatprep.subr.mxu0 0.0
        %1154 = vmatpush1.xpose.msra.mxu0 0.0
        %1155 = vmatprep.subr.mxu0 0.0
        %1156 = vmatpush1.xpose.msra.mxu0 0.0
        %1157 = vmatprep.subr.mxu0 0.0
        %1158 = vmatpush1.xpose.msra.mxu0 0.0
        %1159 = vmatprep.subr.mxu0 0.0
        %1160 = vmatpush1.xpose.msra.mxu0 0.0
        %1161 = vmatprep.subr.mxu0 0.0
        %1162 = vmatpush1.xpose.msra.mxu0 0.0
        %1163 = vmatprep.subr.mxu0 0.0
        %1164 = vmatpush1.xpose.msra.mxu0 %v1131
        %1165 = vmatprep.subr.mxu0 0.0
        %1166 = vmatpush2.xpose.msra.mxu0 0.0
        %1167 = vmatprep.subr.mxu0 0.0
        %1168 = vmatpush2.xpose.msra.mxu0 0.0
        %1169 = vmatprep.subr.mxu0 0.0
        %1170 = vmatpush2.xpose.msra.mxu0 0.0
        %1171 = vmatprep.subr.mxu0 0.0
        %1172 = vmatpush2.xpose.msra.mxu0 0.0
        %1173 = vmatprep.subr.mxu0 0.0
        %1174 = vmatpush2.xpose.msra.mxu0 0.0
        %1175 = vmatprep.subr.mxu0 0.0
        %1176 = vmatpush2.xpose.msra.mxu0 0.0
        %1177 = vmatprep.subr.mxu0 0.0
        %1178 = vmatpush2.xpose.msra.mxu0 0.0
        %1179 = vmatprep.subr.mxu0 0.0
        %1180 = vmatpush2.xpose.msra.mxu0 0.0
        %1181 = vmatprep.subr.mxu0 0.0
        %1182 = vmatpush2.xpose.msra.mxu0 0.0
        %1183 = vmatprep.subr.mxu0 0.0
        %1184 = vmatpush2.xpose.msra.mxu0 0.0
        %1185 = vmatprep.subr.mxu0 0.0
        %1186 = vmatpush2.xpose.msra.mxu0 0.0
        %1187 = vmatprep.subr.mxu0 0.0
        %1188 = vmatpush2.xpose.msra.mxu0 0.0
        %1189 = vmatprep.subr.mxu0 0.0
        %1190 = vmatpush2.xpose.msra.mxu0 0.0
        %1191 = vmatprep.subr.mxu0 0.0
        %1192 = vmatpush2.xpose.msra.mxu0 0.0
        %1193 = vmatprep.subr.mxu0 0.0
        %1194 = vmatpush2.xpose.msra.mxu0 0.0
        %1195 = vmatprep.subr.mxu0 0.0
        %1196 = vmatpush2.xpose.msra.mxu0 0.0
        %1197 = vmatprep.mubr.f32.mxu0 0.0
        %1198 = vmatmul.mubr.f32.gmra.mxu0 %v1055
        %v1199 = vpop.f32.mrf.mxu0
        %v1200 = vadd.f32 %v442, %v1199
        %v1201 = vpop.f32.mrf.mxu0
        %1202 = vdwg.mxu0
        %v1204 = vsel %vm463, %v372, 0
        %1206 = vmatprep.subr.mxu0 0.0
        %1207 = vmatpush1.xpose.msra.mxu0 0.0
        %1208 = vmatprep.subr.mxu0 0.0
        %1209 = vmatpush1.xpose.msra.mxu0 0.0
        %1210 = vmatprep.subr.mxu0 0.0
        %1211 = vmatpush1.xpose.msra.mxu0 0.0
        %1212 = vmatprep.subr.mxu0 0.0
        %1213 = vmatpush1.xpose.msra.mxu0 0.0
        %1214 = vmatprep.subr.mxu0 0.0
        %1215 = vmatpush1.xpose.msra.mxu0 0.0
        %1216 = vmatprep.subr.mxu0 0.0
        %1217 = vmatpush1.xpose.msra.mxu0 0.0
        %1218 = vmatprep.subr.mxu0 0.0
        %1219 = vmatpush1.xpose.msra.mxu0 0.0
        %1220 = vmatprep.subr.mxu0 0.0
        %1221 = vmatpush1.xpose.msra.mxu0 0.0
        %1222 = vmatprep.subr.mxu0 0.0
        %1223 = vmatpush1.xpose.msra.mxu0 0.0
        %1224 = vmatprep.subr.mxu0 0.0
        %1225 = vmatpush1.xpose.msra.mxu0 0.0
        %1226 = vmatprep.subr.mxu0 0.0
        %1227 = vmatpush1.xpose.msra.mxu0 0.0
        %1228 = vmatprep.subr.mxu0 0.0
        %1229 = vmatpush1.xpose.msra.mxu0 0.0
        %1230 = vmatprep.subr.mxu0 0.0
        %1231 = vmatpush1.xpose.msra.mxu0 0.0
        %1232 = vmatprep.subr.mxu0 0.0
        %1233 = vmatpush1.xpose.msra.mxu0 0.0
        %1234 = vmatprep.subr.mxu0 0.0
        %1235 = vmatpush1.xpose.msra.mxu0 0.0
        %1236 = vmatprep.subr.mxu0 0.0
        %1237 = vmatpush1.xpose.msra.mxu0 %v1204
        %1238 = vmatprep.subr.mxu0 0.0
        %1239 = vmatpush2.xpose.msra.mxu0 0.0
        %1240 = vmatprep.subr.mxu0 0.0
        %1241 = vmatpush2.xpose.msra.mxu0 0.0
        %1242 = vmatprep.subr.mxu0 0.0
        %1243 = vmatpush2.xpose.msra.mxu0 0.0
        %1244 = vmatprep.subr.mxu0 0.0
        %1245 = vmatpush2.xpose.msra.mxu0 0.0
        %1246 = vmatprep.subr.mxu0 0.0
        %1247 = vmatpush2.xpose.msra.mxu0 0.0
        %1248 = vmatprep.subr.mxu0 0.0
        %1249 = vmatpush2.xpose.msra.mxu0 0.0
        %1250 = vmatprep.subr.mxu0 0.0
        %1251 = vmatpush2.xpose.msra.mxu0 0.0
        %1252 = vmatprep.subr.mxu0 0.0
        %1253 = vmatpush2.xpose.msra.mxu0 0.0
        %1254 = vmatprep.subr.mxu0 0.0
        %1255 = vmatpush2.xpose.msra.mxu0 0.0
        %1256 = vmatprep.subr.mxu0 0.0
        %1257 = vmatpush2.xpose.msra.mxu0 0.0
        %1258 = vmatprep.subr.mxu0 0.0
        %1259 = vmatpush2.xpose.msra.mxu0 0.0
        %1260 = vmatprep.subr.mxu0 0.0
        %1261 = vmatpush2.xpose.msra.mxu0 0.0
        %1262 = vmatprep.subr.mxu0 0.0
        %1263 = vmatpush2.xpose.msra.mxu0 0.0
        %1264 = vmatprep.subr.mxu0 0.0
        %1265 = vmatpush2.xpose.msra.mxu0 0.0
        %1266 = vmatprep.subr.mxu0 0.0
        %1267 = vmatpush2.xpose.msra.mxu0 0.0
        %1268 = vmatprep.subr.mxu0 0.0
        %1269 = vmatpush2.xpose.msra.mxu0 0.0
        %1270 = vmatprep.mubr.f32.mxu0 0.0
        %1271 = vmatmul.mubr.f32.gmra.mxu0 %v1055
        %v1272 = vpop.f32.mrf.mxu0
        %v1273 = vadd.f32 %v446, %v1272
        %v1274 = vpop.f32.mrf.mxu0
        %1275 = vdwg.mxu0
        %v1277 = vsel %vm463, %v373, 0
        %1279 = vmatprep.subr.mxu0 0.0
        %1280 = vmatpush1.xpose.msra.mxu0 0.0
        %1281 = vmatprep.subr.mxu0 0.0
        %1282 = vmatpush1.xpose.msra.mxu0 0.0
        %1283 = vmatprep.subr.mxu0 0.0
        %1284 = vmatpush1.xpose.msra.mxu0 0.0
        %1285 = vmatprep.subr.mxu0 0.0
        %1286 = vmatpush1.xpose.msra.mxu0 0.0
        %1287 = vmatprep.subr.mxu0 0.0
        %1288 = vmatpush1.xpose.msra.mxu0 0.0
        %1289 = vmatprep.subr.mxu0 0.0
        %1290 = vmatpush1.xpose.msra.mxu0 0.0
        %1291 = vmatprep.subr.mxu0 0.0
        %1292 = vmatpush1.xpose.msra.mxu0 0.0
        %1293 = vmatprep.subr.mxu0 0.0
        %1294 = vmatpush1.xpose.msra.mxu0 0.0
        %1295 = vmatprep.subr.mxu0 0.0
        %1296 = vmatpush1.xpose.msra.mxu0 0.0
        %1297 = vmatprep.subr.mxu0 0.0
        %1298 = vmatpush1.xpose.msra.mxu0 0.0
        %1299 = vmatprep.subr.mxu0 0.0
        %1300 = vmatpush1.xpose.msra.mxu0 0.0
        %1301 = vmatprep.subr.mxu0 0.0
        %1302 = vmatpush1.xpose.msra.mxu0 0.0
        %1303 = vmatprep.subr.mxu0 0.0
        %1304 = vmatpush1.xpose.msra.mxu0 0.0
        %1305 = vmatprep.subr.mxu0 0.0
        %1306 = vmatpush1.xpose.msra.mxu0 0.0
        %1307 = vmatprep.subr.mxu0 0.0
        %1308 = vmatpush1.xpose.msra.mxu0 0.0
        %1309 = vmatprep.subr.mxu0 0.0
        %1310 = vmatpush1.xpose.msra.mxu0 %v1277
        %1311 = vmatprep.subr.mxu0 0.0
        %1312 = vmatpush2.xpose.msra.mxu0 0.0
        %1313 = vmatprep.subr.mxu0 0.0
        %1314 = vmatpush2.xpose.msra.mxu0 0.0
        %1315 = vmatprep.subr.mxu0 0.0
        %1316 = vmatpush2.xpose.msra.mxu0 0.0
        %1317 = vmatprep.subr.mxu0 0.0
        %1318 = vmatpush2.xpose.msra.mxu0 0.0
        %1319 = vmatprep.subr.mxu0 0.0
        %1320 = vmatpush2.xpose.msra.mxu0 0.0
        %1321 = vmatprep.subr.mxu0 0.0
        %1322 = vmatpush2.xpose.msra.mxu0 0.0
        %1323 = vmatprep.subr.mxu0 0.0
        %1324 = vmatpush2.xpose.msra.mxu0 0.0
        %1325 = vmatprep.subr.mxu0 0.0
        %1326 = vmatpush2.xpose.msra.mxu0 0.0
        %1327 = vmatprep.subr.mxu0 0.0
        %1328 = vmatpush2.xpose.msra.mxu0 0.0
        %1329 = vmatprep.subr.mxu0 0.0
        %1330 = vmatpush2.xpose.msra.mxu0 0.0
        %1331 = vmatprep.subr.mxu0 0.0
        %1332 = vmatpush2.xpose.msra.mxu0 0.0
        %1333 = vmatprep.subr.mxu0 0.0
        %1334 = vmatpush2.xpose.msra.mxu0 0.0
        %1335 = vmatprep.subr.mxu0 0.0
        %1336 = vmatpush2.xpose.msra.mxu0 0.0
        %1337 = vmatprep.subr.mxu0 0.0
        %1338 = vmatpush2.xpose.msra.mxu0 0.0
        %1339 = vmatprep.subr.mxu0 0.0
        %1340 = vmatpush2.xpose.msra.mxu0 0.0
        %1341 = vmatprep.subr.mxu0 0.0
        %1342 = vmatpush2.xpose.msra.mxu0 0.0
        %1343 = vmatprep.mubr.f32.mxu0 0.0
        %1344 = vmatmul.mubr.f32.gmra.mxu0 %v1055
        %v1345 = vpop.f32.mrf.mxu0
        %v1346 = vadd.f32 %v450, %v1345
        %v1347 = vpop.f32.mrf.mxu0
        %1348 = vdwg.mxu0
        %vm1349 = vcmask 64512
        %v1351 = vsel %vm1349, %v537, 0
        %v1354 = vsel %vm1349, %v832, 0
        %1356 = vmatprep.subr.mxu0 0.0
        %1357 = vmatpush1.xpose.msra.mxu0 0.0
        %1358 = vmatprep.subr.mxu0 0.0
        %1359 = vmatpush1.xpose.msra.mxu0 0.0
        %1360 = vmatprep.subr.mxu0 0.0
        %1361 = vmatpush1.xpose.msra.mxu0 0.0
        %1362 = vmatprep.subr.mxu0 0.0
        %1363 = vmatpush1.xpose.msra.mxu0 0.0
        %1364 = vmatprep.subr.mxu0 0.0
        %1365 = vmatpush1.xpose.msra.mxu0 0.0
        %1366 = vmatprep.subr.mxu0 0.0
        %1367 = vmatpush1.xpose.msra.mxu0 0.0
        %1368 = vmatprep.subr.mxu0 0.0
        %1369 = vmatpush1.xpose.msra.mxu0 0.0
        %1370 = vmatprep.subr.mxu0 0.0
        %1371 = vmatpush1.xpose.msra.mxu0 0.0
        %1372 = vmatprep.subr.mxu0 0.0
        %1373 = vmatpush1.xpose.msra.mxu0 0.0
        %1374 = vmatprep.subr.mxu0 0.0
        %1375 = vmatpush1.xpose.msra.mxu0 0.0
        %1376 = vmatprep.subr.mxu0 0.0
        %1377 = vmatpush1.xpose.msra.mxu0 0.0
        %1378 = vmatprep.subr.mxu0 0.0
        %1379 = vmatpush1.xpose.msra.mxu0 0.0
        %1380 = vmatprep.subr.mxu0 0.0
        %1381 = vmatpush1.xpose.msra.mxu0 0.0
        %1382 = vmatprep.subr.mxu0 0.0
        %1383 = vmatpush1.xpose.msra.mxu0 0.0
        %1384 = vmatprep.subr.mxu0 0.0
        %1385 = vmatpush1.xpose.msra.mxu0 0.0
        %1386 = vmatprep.subr.mxu0 0.0
        %1387 = vmatpush1.xpose.msra.mxu0 %v1354
        %1388 = vmatprep.subr.mxu0 0.0
        %1389 = vmatpush2.xpose.msra.mxu0 0.0
        %1390 = vmatprep.subr.mxu0 0.0
        %1391 = vmatpush2.xpose.msra.mxu0 0.0
        %1392 = vmatprep.subr.mxu0 0.0
        %1393 = vmatpush2.xpose.msra.mxu0 0.0
        %1394 = vmatprep.subr.mxu0 0.0
        %1395 = vmatpush2.xpose.msra.mxu0 0.0
        %1396 = vmatprep.subr.mxu0 0.0
        %1397 = vmatpush2.xpose.msra.mxu0 0.0
        %1398 = vmatprep.subr.mxu0 0.0
        %1399 = vmatpush2.xpose.msra.mxu0 0.0
        %1400 = vmatprep.subr.mxu0 0.0
        %1401 = vmatpush2.xpose.msra.mxu0 0.0
        %1402 = vmatprep.subr.mxu0 0.0
        %1403 = vmatpush2.xpose.msra.mxu0 0.0
        %1404 = vmatprep.subr.mxu0 0.0
        %1405 = vmatpush2.xpose.msra.mxu0 0.0
        %1406 = vmatprep.subr.mxu0 0.0
        %1407 = vmatpush2.xpose.msra.mxu0 0.0
        %1408 = vmatprep.subr.mxu0 0.0
        %1409 = vmatpush2.xpose.msra.mxu0 0.0
        %1410 = vmatprep.subr.mxu0 0.0
        %1411 = vmatpush2.xpose.msra.mxu0 0.0
        %1412 = vmatprep.subr.mxu0 0.0
        %1413 = vmatpush2.xpose.msra.mxu0 0.0
        %1414 = vmatprep.subr.mxu0 0.0
        %1415 = vmatpush2.xpose.msra.mxu0 0.0
        %1416 = vmatprep.subr.mxu0 0.0
        %1417 = vmatpush2.xpose.msra.mxu0 0.0
        %1418 = vmatprep.subr.mxu0 0.0
        %1419 = vmatpush2.xpose.msra.mxu0 0.0
        %1420 = vmatprep.mubr.f32.mxu0 0.0
        %1421 = vmatmul.mubr.f32.gmra.mxu0 %v1351
        %v1422 = vpop.f32.mrf.mxu0
        %v1423 = vadd.f32 0.0, %v1422
        %v1424 = vpop.f32.mrf.mxu0
        %1425 = vdwg.mxu0
        %v1427 = vsel %vm1349, %v610, 0
        %v1430 = vsel %vm1349, %v905, 0
        %1432 = vmatprep.subr.mxu0 0.0
        %1433 = vmatpush1.xpose.msra.mxu0 0.0
        %1434 = vmatprep.subr.mxu0 0.0
        %1435 = vmatpush1.xpose.msra.mxu0 0.0
        %1436 = vmatprep.subr.mxu0 0.0
        %1437 = vmatpush1.xpose.msra.mxu0 0.0
        %1438 = vmatprep.subr.mxu0 0.0
        %1439 = vmatpush1.xpose.msra.mxu0 0.0
        %1440 = vmatprep.subr.mxu0 0.0
        %1441 = vmatpush1.xpose.msra.mxu0 0.0
        %1442 = vmatprep.subr.mxu0 0.0
        %1443 = vmatpush1.xpose.msra.mxu0 0.0
        %1444 = vmatprep.subr.mxu0 0.0
        %1445 = vmatpush1.xpose.msra.mxu0 0.0
        %1446 = vmatprep.subr.mxu0 0.0
        %1447 = vmatpush1.xpose.msra.mxu0 0.0
        %1448 = vmatprep.subr.mxu0 0.0
        %1449 = vmatpush1.xpose.msra.mxu0 0.0
        %1450 = vmatprep.subr.mxu0 0.0
        %1451 = vmatpush1.xpose.msra.mxu0 0.0
        %1452 = vmatprep.subr.mxu0 0.0
        %1453 = vmatpush1.xpose.msra.mxu0 0.0
        %1454 = vmatprep.subr.mxu0 0.0
        %1455 = vmatpush1.xpose.msra.mxu0 0.0
        %1456 = vmatprep.subr.mxu0 0.0
        %1457 = vmatpush1.xpose.msra.mxu0 0.0
        %1458 = vmatprep.subr.mxu0 0.0
        %1459 = vmatpush1.xpose.msra.mxu0 0.0
        %1460 = vmatprep.subr.mxu0 0.0
        %1461 = vmatpush1.xpose.msra.mxu0 0.0
        %1462 = vmatprep.subr.mxu0 0.0
        %1463 = vmatpush1.xpose.msra.mxu0 %v1430
        %1464 = vmatprep.subr.mxu0 0.0
        %1465 = vmatpush2.xpose.msra.mxu0 0.0
        %1466 = vmatprep.subr.mxu0 0.0
        %1467 = vmatpush2.xpose.msra.mxu0 0.0
        %1468 = vmatprep.subr.mxu0 0.0
        %1469 = vmatpush2.xpose.msra.mxu0 0.0
        %1470 = vmatprep.subr.mxu0 0.0
        %1471 = vmatpush2.xpose.msra.mxu0 0.0
        %1472 = vmatprep.subr.mxu0 0.0
        %1473 = vmatpush2.xpose.msra.mxu0 0.0
        %1474 = vmatprep.subr.mxu0 0.0
        %1475 = vmatpush2.xpose.msra.mxu0 0.0
        %1476 = vmatprep.subr.mxu0 0.0
        %1477 = vmatpush2.xpose.msra.mxu0 0.0
        %1478 = vmatprep.subr.mxu0 0.0
        %1479 = vmatpush2.xpose.msra.mxu0 0.0
        %1480 = vmatprep.subr.mxu0 0.0
        %1481 = vmatpush2.xpose.msra.mxu0 0.0
        %1482 = vmatprep.subr.mxu0 0.0
        %1483 = vmatpush2.xpose.msra.mxu0 0.0
        %1484 = vmatprep.subr.mxu0 0.0
        %1485 = vmatpush2.xpose.msra.mxu0 0.0
        %1486 = vmatprep.subr.mxu0 0.0
        %1487 = vmatpush2.xpose.msra.mxu0 0.0
        %1488 = vmatprep.subr.mxu0 0.0
        %1489 = vmatpush2.xpose.msra.mxu0 0.0
        %1490 = vmatprep.subr.mxu0 0.0
        %1491 = vmatpush2.xpose.msra.mxu0 0.0
        %1492 = vmatprep.subr.mxu0 0.0
        %1493 = vmatpush2.xpose.msra.mxu0 0.0
        %1494 = vmatprep.subr.mxu0 0.0
        %1495 = vmatpush2.xpose.msra.mxu0 0.0
        %1496 = vmatprep.mubr.f32.mxu0 0.0
        %1497 = vmatmul.mubr.f32.gmra.mxu0 %v1427
        %v1498 = vpop.f32.mrf.mxu0
        %v1499 = vadd.f32 0.0, %v1498
        %v1500 = vpop.f32.mrf.mxu0
        %1501 = vdwg.mxu0
        %v1503 = vsel %vm1349, %v683, 0
        %v1506 = vsel %vm1349, %v978, 0
        %1508 = vmatprep.subr.mxu0 0.0
        %1509 = vmatpush1.xpose.msra.mxu0 0.0
        %1510 = vmatprep.subr.mxu0 0.0
        %1511 = vmatpush1.xpose.msra.mxu0 0.0
        %1512 = vmatprep.subr.mxu0 0.0
        %1513 = vmatpush1.xpose.msra.mxu0 0.0
        %1514 = vmatprep.subr.mxu0 0.0
        %1515 = vmatpush1.xpose.msra.mxu0 0.0
        %1516 = vmatprep.subr.mxu0 0.0
        %1517 = vmatpush1.xpose.msra.mxu0 0.0
        %1518 = vmatprep.subr.mxu0 0.0
        %1519 = vmatpush1.xpose.msra.mxu0 0.0
        %1520 = vmatprep.subr.mxu0 0.0
        %1521 = vmatpush1.xpose.msra.mxu0 0.0
        %1522 = vmatprep.subr.mxu0 0.0
        %1523 = vmatpush1.xpose.msra.mxu0 0.0
        %1524 = vmatprep.subr.mxu0 0.0
        %1525 = vmatpush1.xpose.msra.mxu0 0.0
        %1526 = vmatprep.subr.mxu0 0.0
        %1527 = vmatpush1.xpose.msra.mxu0 0.0
        %1528 = vmatprep.subr.mxu0 0.0
        %1529 = vmatpush1.xpose.msra.mxu0 0.0
        %1530 = vmatprep.subr.mxu0 0.0
        %1531 = vmatpush1.xpose.msra.mxu0 0.0
        %1532 = vmatprep.subr.mxu0 0.0
        %1533 = vmatpush1.xpose.msra.mxu0 0.0
        %1534 = vmatprep.subr.mxu0 0.0
        %1535 = vmatpush1.xpose.msra.mxu0 0.0
        %1536 = vmatprep.subr.mxu0 0.0
        %1537 = vmatpush1.xpose.msra.mxu0 0.0
        %1538 = vmatprep.subr.mxu0 0.0
        %1539 = vmatpush1.xpose.msra.mxu0 %v1506
        %1540 = vmatprep.subr.mxu0 0.0
        %1541 = vmatpush2.xpose.msra.mxu0 0.0
        %1542 = vmatprep.subr.mxu0 0.0
        %1543 = vmatpush2.xpose.msra.mxu0 0.0
        %1544 = vmatprep.subr.mxu0 0.0
        %1545 = vmatpush2.xpose.msra.mxu0 0.0
        %1546 = vmatprep.subr.mxu0 0.0
        %1547 = vmatpush2.xpose.msra.mxu0 0.0
        %1548 = vmatprep.subr.mxu0 0.0
        %1549 = vmatpush2.xpose.msra.mxu0 0.0
        %1550 = vmatprep.subr.mxu0 0.0
        %1551 = vmatpush2.xpose.msra.mxu0 0.0
        %1552 = vmatprep.subr.mxu0 0.0
        %1553 = vmatpush2.xpose.msra.mxu0 0.0
        %1554 = vmatprep.subr.mxu0 0.0
        %1555 = vmatpush2.xpose.msra.mxu0 0.0
        %1556 = vmatprep.subr.mxu0 0.0
        %1557 = vmatpush2.xpose.msra.mxu0 0.0
        %1558 = vmatprep.subr.mxu0 0.0
        %1559 = vmatpush2.xpose.msra.mxu0 0.0
        %1560 = vmatprep.subr.mxu0 0.0
        %1561 = vmatpush2.xpose.msra.mxu0 0.0
        %1562 = vmatprep.subr.mxu0 0.0
        %1563 = vmatpush2.xpose.msra.mxu0 0.0
        %1564 = vmatprep.subr.mxu0 0.0
        %1565 = vmatpush2.xpose.msra.mxu0 0.0
        %1566 = vmatprep.subr.mxu0 0.0
        %1567 = vmatpush2.xpose.msra.mxu0 0.0
        %1568 = vmatprep.subr.mxu0 0.0
        %1569 = vmatpush2.xpose.msra.mxu0 0.0
        %1570 = vmatprep.subr.mxu0 0.0
        %1571 = vmatpush2.xpose.msra.mxu0 0.0
        %1572 = vmatprep.mubr.f32.mxu0 0.0
        %1573 = vmatmul.mubr.f32.gmra.mxu0 %v1503
        %v1574 = vpop.f32.mrf.mxu0
        %v1575 = vadd.f32 0.0, %v1574
        %v1576 = vpop.f32.mrf.mxu0
        %1577 = vdwg.mxu0
        %v1579 = vsel %vm1349, %v756, 0
        %v1582 = vsel %vm1349, %v1051, 0
        %1584 = vmatprep.subr.mxu0 0.0
        %1585 = vmatpush1.xpose.msra.mxu0 0.0
        %1586 = vmatprep.subr.mxu0 0.0
        %1587 = vmatpush1.xpose.msra.mxu0 0.0
        %1588 = vmatprep.subr.mxu0 0.0
        %1589 = vmatpush1.xpose.msra.mxu0 0.0
        %1590 = vmatprep.subr.mxu0 0.0
        %1591 = vmatpush1.xpose.msra.mxu0 0.0
        %1592 = vmatprep.subr.mxu0 0.0
        %1593 = vmatpush1.xpose.msra.mxu0 0.0
        %1594 = vmatprep.subr.mxu0 0.0
        %1595 = vmatpush1.xpose.msra.mxu0 0.0
        %1596 = vmatprep.subr.mxu0 0.0
        %1597 = vmatpush1.xpose.msra.mxu0 0.0
        %1598 = vmatprep.subr.mxu0 0.0
        %1599 = vmatpush1.xpose.msra.mxu0 0.0
        %1600 = vmatprep.subr.mxu0 0.0
        %1601 = vmatpush1.xpose.msra.mxu0 0.0
        %1602 = vmatprep.subr.mxu0 0.0
        %1603 = vmatpush1.xpose.msra.mxu0 0.0
        %1604 = vmatprep.subr.mxu0 0.0
        %1605 = vmatpush1.xpose.msra.mxu0 0.0
        %1606 = vmatprep.subr.mxu0 0.0
        %1607 = vmatpush1.xpose.msra.mxu0 0.0
        %1608 = vmatprep.subr.mxu0 0.0
        %1609 = vmatpush1.xpose.msra.mxu0 0.0
        %1610 = vmatprep.subr.mxu0 0.0
        %1611 = vmatpush1.xpose.msra.mxu0 0.0
        %1612 = vmatprep.subr.mxu0 0.0
        %1613 = vmatpush1.xpose.msra.mxu0 0.0
        %1614 = vmatprep.subr.mxu0 0.0
        %1615 = vmatpush1.xpose.msra.mxu0 %v1582
        %1616 = vmatprep.subr.mxu0 0.0
        %1617 = vmatpush2.xpose.msra.mxu0 0.0
        %1618 = vmatprep.subr.mxu0 0.0
        %1619 = vmatpush2.xpose.msra.mxu0 0.0
        %1620 = vmatprep.subr.mxu0 0.0
        %1621 = vmatpush2.xpose.msra.mxu0 0.0
        %1622 = vmatprep.subr.mxu0 0.0
        %1623 = vmatpush2.xpose.msra.mxu0 0.0
        %1624 = vmatprep.subr.mxu0 0.0
        %1625 = vmatpush2.xpose.msra.mxu0 0.0
        %1626 = vmatprep.subr.mxu0 0.0
        %1627 = vmatpush2.xpose.msra.mxu0 0.0
        %1628 = vmatprep.subr.mxu0 0.0
        %1629 = vmatpush2.xpose.msra.mxu0 0.0
        %1630 = vmatprep.subr.mxu0 0.0
        %1631 = vmatpush2.xpose.msra.mxu0 0.0
        %1632 = vmatprep.subr.mxu0 0.0
        %1633 = vmatpush2.xpose.msra.mxu0 0.0
        %1634 = vmatprep.subr.mxu0 0.0
        %1635 = vmatpush2.xpose.msra.mxu0 0.0
        %1636 = vmatprep.subr.mxu0 0.0
        %1637 = vmatpush2.xpose.msra.mxu0 0.0
        %1638 = vmatprep.subr.mxu0 0.0
        %1639 = vmatpush2.xpose.msra.mxu0 0.0
        %1640 = vmatprep.subr.mxu0 0.0
        %1641 = vmatpush2.xpose.msra.mxu0 0.0
        %1642 = vmatprep.subr.mxu0 0.0
        %1643 = vmatpush2.xpose.msra.mxu0 0.0
        %1644 = vmatprep.subr.mxu0 0.0
        %1645 = vmatpush2.xpose.msra.mxu0 0.0
        %1646 = vmatprep.subr.mxu0 0.0
        %1647 = vmatpush2.xpose.msra.mxu0 0.0
        %1648 = vmatprep.mubr.f32.mxu0 0.0
        %1649 = vmatmul.mubr.f32.gmra.mxu0 %v1579
        %v1650 = vpop.f32.mrf.mxu0
        %v1651 = vadd.f32 0.0, %v1650
        %v1652 = vpop.f32.mrf.mxu0
        %1653 = vdwg.mxu0
        %v1654 = vsel %vm1349, %v1423, -inf
        %1655 = vmax.xlane.f32.xlu0 %v1654
        %v1656 = vpop.xlane.xlu0 %1655
        %v1657 = vsel %vm1349, %v1499, -inf
        %1658 = vmax.xlane.f32.xlu0 %v1657
        %v1659 = vpop.xlane.xlu0 %1658
        %v1660 = vsel %vm1349, %v1575, -inf
        %1661 = vmax.xlane.f32.xlu0 %v1660
        %v1662 = vpop.xlane.xlu0 %1661
        %v1663 = vsel %vm1349, %v1651, -inf
        %1664 = vmax.xlane.f32.xlu0 %v1663
        %v1665 = vpop.xlane.xlu0 %1664
        %v1666 = vsub.f32 %v1423, %v1656
        %v1667 = vsub.f32 %v1499, %v1659
        %v1668 = vsub.f32 %v1575, %v1662
        %v1669 = vsub.f32 %v1651, %v1665
        %v1670 = vmul.f32 %v1666, 1.442695
        %v1671 = vpow.pop %v1670
        %v1672 = vmul.f32 %v1667, 1.442695
        %v1673 = vpow.pop %v1672
        %v1674 = vmul.f32 %v1668, 1.442695
        %v1675 = vpow.pop %v1674
        %v1676 = vmul.f32 %v1669, 1.442695
        %v1677 = vpow.pop %v1676
        %v1678 = vsel %vm1349, %v1671, 0.0
        %1679 = vadd.xlane.f32.xlu0 %v1678
        %v1680 = vpop.xlane.xlu0 %1679
        %v1681 = vsel %vm1349, %v1673, 0.0
        %1682 = vadd.xlane.f32.xlu0 %v1681
        %v1683 = vpop.xlane.xlu0 %1682
        %v1684 = vsel %vm1349, %v1675, 0.0
        %1685 = vadd.xlane.f32.xlu0 %v1684
        %v1686 = vpop.xlane.xlu0 %1685
        %v1687 = vsel %vm1349, %v1677, 0.0
        %1688 = vadd.xlane.f32.xlu0 %v1687
        %v1689 = vpop.xlane.xlu0 %1688
        %v1690 = vrcp.pop %v1680
        %v1691 = vrcp.pop %v1683
        %v1692 = vrcp.pop %v1686
        %v1693 = vrcp.pop %v1689
        %v1694 = vmul.f32 %v1671, %v1690
        %v1695 = vmul.f32 %v1673, %v1691
        %v1696 = vmul.f32 %v1675, %v1692
        %v1697 = vmul.f32 %v1677, %v1693
        %v1699 = vsel %vm1349, %v1694, 0
        %1701 = vmatprep.subr.mxu0 0.0
        %1702 = vmatpush1.msra.mxu0 0.0
        %1703 = vmatprep.subr.mxu0 0.0
        %1704 = vmatpush1.msra.mxu0 0.0
        %1705 = vmatprep.subr.mxu0 0.0
        %1706 = vmatpush1.msra.mxu0 0.0
        %1707 = vmatprep.subr.mxu0 0.0
        %1708 = vmatpush1.msra.mxu0 0.0
        %1709 = vmatprep.subr.mxu0 0.0
        %1710 = vmatpush1.msra.mxu0 0.0
        %1711 = vmatprep.subr.mxu0 0.0
        %1712 = vmatpush1.msra.mxu0 0.0
        %1713 = vmatprep.subr.mxu0 0.0
        %1714 = vmatpush1.msra.mxu0 0.0
        %1715 = vmatprep.subr.mxu0 0.0
        %1716 = vmatpush1.msra.mxu0 0.0
        %1717 = vmatprep.subr.mxu0 0.0
        %1718 = vmatpush1.msra.mxu0 0.0
        %1719 = vmatprep.subr.mxu0 0.0
        %1720 = vmatpush1.msra.mxu0 0.0
        %1721 = vmatprep.subr.mxu0 0.0
        %1722 = vmatpush1.msra.mxu0 0.0
        %1723 = vmatprep.subr.mxu0 0.0
        %1724 = vmatpush1.msra.mxu0 0.0
        %1725 = vmatprep.subr.mxu0 0.0
        %1726 = vmatpush1.msra.mxu0 0.0
        %1727 = vmatprep.subr.mxu0 0.0
        %1728 = vmatpush1.msra.mxu0 0.0
        %1729 = vmatprep.subr.mxu0 0.0
        %1730 = vmatpush1.msra.mxu0 0.0
        %1731 = vmatprep.subr.mxu0 0.0
        %1732 = vmatpush1.msra.mxu0 %v1127
        %1733 = vmatprep.subr.mxu0 0.0
        %1734 = vmatpush2.msra.mxu0 0.0
        %1735 = vmatprep.subr.mxu0 0.0
        %1736 = vmatpush2.msra.mxu0 0.0
        %1737 = vmatprep.subr.mxu0 0.0
        %1738 = vmatpush2.msra.mxu0 0.0
        %1739 = vmatprep.subr.mxu0 0.0
        %1740 = vmatpush2.msra.mxu0 0.0
        %1741 = vmatprep.subr.mxu0 0.0
        %1742 = vmatpush2.msra.mxu0 0.0
        %1743 = vmatprep.subr.mxu0 0.0
        %1744 = vmatpush2.msra.mxu0 0.0
        %1745 = vmatprep.subr.mxu0 0.0
        %1746 = vmatpush2.msra.mxu0 0.0
        %1747 = vmatprep.subr.mxu0 0.0
        %1748 = vmatpush2.msra.mxu0 0.0
        %1749 = vmatprep.subr.mxu0 0.0
        %1750 = vmatpush2.msra.mxu0 0.0
        %1751 = vmatprep.subr.mxu0 0.0
        %1752 = vmatpush2.msra.mxu0 0.0
        %1753 = vmatprep.subr.mxu0 0.0
        %1754 = vmatpush2.msra.mxu0 0.0
        %1755 = vmatprep.subr.mxu0 0.0
        %1756 = vmatpush2.msra.mxu0 0.0
        %1757 = vmatprep.subr.mxu0 0.0
        %1758 = vmatpush2.msra.mxu0 0.0
        %1759 = vmatprep.subr.mxu0 0.0
        %1760 = vmatpush2.msra.mxu0 0.0
        %1761 = vmatprep.subr.mxu0 0.0
        %1762 = vmatpush2.msra.mxu0 0.0
        %1763 = vmatprep.subr.mxu0 0.0
        %1764 = vmatpush2.msra.mxu0 0.0
        %1765 = vmatprep.mubr.f32.mxu0 0.0
        %1766 = vmatmul.mubr.f32.gmra.mxu0 %v1699
        %v1767 = vpop.f32.mrf.mxu0
        %v1768 = vadd.f32 0.0, %v1767
        %v1769 = vpop.f32.mrf.mxu0
        %1770 = vdwg.mxu0
        %v1772 = vsel %vm1349, %v1695, 0
        %1774 = vmatprep.subr.mxu0 0.0
        %1775 = vmatpush1.msra.mxu0 0.0
        %1776 = vmatprep.subr.mxu0 0.0
        %1777 = vmatpush1.msra.mxu0 0.0
        %1778 = vmatprep.subr.mxu0 0.0
        %1779 = vmatpush1.msra.mxu0 0.0
        %1780 = vmatprep.subr.mxu0 0.0
        %1781 = vmatpush1.msra.mxu0 0.0
        %1782 = vmatprep.subr.mxu0 0.0
        %1783 = vmatpush1.msra.mxu0 0.0
        %1784 = vmatprep.subr.mxu0 0.0
        %1785 = vmatpush1.msra.mxu0 0.0
        %1786 = vmatprep.subr.mxu0 0.0
        %1787 = vmatpush1.msra.mxu0 0.0
        %1788 = vmatprep.subr.mxu0 0.0
        %1789 = vmatpush1.msra.mxu0 0.0
        %1790 = vmatprep.subr.mxu0 0.0
        %1791 = vmatpush1.msra.mxu0 0.0
        %1792 = vmatprep.subr.mxu0 0.0
        %1793 = vmatpush1.msra.mxu0 0.0
        %1794 = vmatprep.subr.mxu0 0.0
        %1795 = vmatpush1.msra.mxu0 0.0
        %1796 = vmatprep.subr.mxu0 0.0
        %1797 = vmatpush1.msra.mxu0 0.0
        %1798 = vmatprep.subr.mxu0 0.0
        %1799 = vmatpush1.msra.mxu0 0.0
        %1800 = vmatprep.subr.mxu0 0.0
        %1801 = vmatpush1.msra.mxu0 0.0
        %1802 = vmatprep.subr.mxu0 0.0
        %1803 = vmatpush1.msra.mxu0 0.0
        %1804 = vmatprep.subr.mxu0 0.0
        %1805 = vmatpush1.msra.mxu0 %v1200
        %1806 = vmatprep.subr.mxu0 0.0
        %1807 = vmatpush2.msra.mxu0 0.0
        %1808 = vmatprep.subr.mxu0 0.0
        %1809 = vmatpush2.msra.mxu0 0.0
        %1810 = vmatprep.subr.mxu0 0.0
        %1811 = vmatpush2.msra.mxu0 0.0
        %1812 = vmatprep.subr.mxu0 0.0
        %1813 = vmatpush2.msra.mxu0 0.0
        %1814 = vmatprep.subr.mxu0 0.0
        %1815 = vmatpush2.msra.mxu0 0.0
        %1816 = vmatprep.subr.mxu0 0.0
        %1817 = vmatpush2.msra.mxu0 0.0
        %1818 = vmatprep.subr.mxu0 0.0
        %1819 = vmatpush2.msra.mxu0 0.0
        %1820 = vmatprep.subr.mxu0 0.0
        %1821 = vmatpush2.msra.mxu0 0.0
        %1822 = vmatprep.subr.mxu0 0.0
        %1823 = vmatpush2.msra.mxu0 0.0
        %1824 = vmatprep.subr.mxu0 0.0
        %1825 = vmatpush2.msra.mxu0 0.0
        %1826 = vmatprep.subr.mxu0 0.0
        %1827 = vmatpush2.msra.mxu0 0.0
        %1828 = vmatprep.subr.mxu0 0.0
        %1829 = vmatpush2.msra.mxu0 0.0
        %1830 = vmatprep.subr.mxu0 0.0
        %1831 = vmatpush2.msra.mxu0 0.0
        %1832 = vmatprep.subr.mxu0 0.0
        %1833 = vmatpush2.msra.mxu0 0.0
        %1834 = vmatprep.subr.mxu0 0.0
        %1835 = vmatpush2.msra.mxu0 0.0
        %1836 = vmatprep.subr.mxu0 0.0
        %1837 = vmatpush2.msra.mxu0 0.0
        %1838 = vmatprep.mubr.f32.mxu0 0.0
        %1839 = vmatmul.mubr.f32.gmra.mxu0 %v1772
        %v1840 = vpop.f32.mrf.mxu0
        %v1841 = vadd.f32 0.0, %v1840
        %v1842 = vpop.f32.mrf.mxu0
        %1843 = vdwg.mxu0
        %v1845 = vsel %vm1349, %v1696, 0
        %1847 = vmatprep.subr.mxu0 0.0
        %1848 = vmatpush1.msra.mxu0 0.0
        %1849 = vmatprep.subr.mxu0 0.0
        %1850 = vmatpush1.msra.mxu0 0.0
        %1851 = vmatprep.subr.mxu0 0.0
        %1852 = vmatpush1.msra.mxu0 0.0
        %1853 = vmatprep.subr.mxu0 0.0
        %1854 = vmatpush1.msra.mxu0 0.0
        %1855 = vmatprep.subr.mxu0 0.0
        %1856 = vmatpush1.msra.mxu0 0.0
        %1857 = vmatprep.subr.mxu0 0.0
        %1858 = vmatpush1.msra.mxu0 0.0
        %1859 = vmatprep.subr.mxu0 0.0
        %1860 = vmatpush1.msra.mxu0 0.0
        %1861 = vmatprep.subr.mxu0 0.0
        %1862 = vmatpush1.msra.mxu0 0.0
        %1863 = vmatprep.subr.mxu0 0.0
        %1864 = vmatpush1.msra.mxu0 0.0
        %1865 = vmatprep.subr.mxu0 0.0
        %1866 = vmatpush1.msra.mxu0 0.0
        %1867 = vmatprep.subr.mxu0 0.0
        %1868 = vmatpush1.msra.mxu0 0.0
        %1869 = vmatprep.subr.mxu0 0.0
        %1870 = vmatpush1.msra.mxu0 0.0
        %1871 = vmatprep.subr.mxu0 0.0
        %1872 = vmatpush1.msra.mxu0 0.0
        %1873 = vmatprep.subr.mxu0 0.0
        %1874 = vmatpush1.msra.mxu0 0.0
        %1875 = vmatprep.subr.mxu0 0.0
        %1876 = vmatpush1.msra.mxu0 0.0
        %1877 = vmatprep.subr.mxu0 0.0
        %1878 = vmatpush1.msra.mxu0 %v1273
        %1879 = vmatprep.subr.mxu0 0.0
        %1880 = vmatpush2.msra.mxu0 0.0
        %1881 = vmatprep.subr.mxu0 0.0
        %1882 = vmatpush2.msra.mxu0 0.0
        %1883 = vmatprep.subr.mxu0 0.0
        %1884 = vmatpush2.msra.mxu0 0.0
        %1885 = vmatprep.subr.mxu0 0.0
        %1886 = vmatpush2.msra.mxu0 0.0
        %1887 = vmatprep.subr.mxu0 0.0
        %1888 = vmatpush2.msra.mxu0 0.0
        %1889 = vmatprep.subr.mxu0 0.0
        %1890 = vmatpush2.msra.mxu0 0.0
        %1891 = vmatprep.subr.mxu0 0.0
        %1892 = vmatpush2.msra.mxu0 0.0
        %1893 = vmatprep.subr.mxu0 0.0
        %1894 = vmatpush2.msra.mxu0 0.0
        %1895 = vmatprep.subr.mxu0 0.0
        %1896 = vmatpush2.msra.mxu0 0.0
        %1897 = vmatprep.subr.mxu0 0.0
        %1898 = vmatpush2.msra.mxu0 0.0
        %1899 = vmatprep.subr.mxu0 0.0
        %1900 = vmatpush2.msra.mxu0 0.0
        %1901 = vmatprep.subr.mxu0 0.0
        %1902 = vmatpush2.msra.mxu0 0.0
        %1903 = vmatprep.subr.mxu0 0.0
        %1904 = vmatpush2.msra.mxu0 0.0
        %1905 = vmatprep.subr.mxu0 0.0
        %1906 = vmatpush2.msra.mxu0 0.0
        %1907 = vmatprep.subr.mxu0 0.0
        %1908 = vmatpush2.msra.mxu0 0.0
        %1909 = vmatprep.subr.mxu0 0.0
        %1910 = vmatpush2.msra.mxu0 0.0
        %1911 = vmatprep.mubr.f32.mxu0 0.0
        %1912 = vmatmul.mubr.f32.gmra.mxu0 %v1845
        %v1913 = vpop.f32.mrf.mxu0
        %v1914 = vadd.f32 0.0, %v1913
        %v1915 = vpop.f32.mrf.mxu0
        %1916 = vdwg.mxu0
        %v1918 = vsel %vm1349, %v1697, 0
        %1920 = vmatprep.subr.mxu0 0.0
        %1921 = vmatpush1.msra.mxu0 0.0
        %1922 = vmatprep.subr.mxu0 0.0
        %1923 = vmatpush1.msra.mxu0 0.0
        %1924 = vmatprep.subr.mxu0 0.0
        %1925 = vmatpush1.msra.mxu0 0.0
        %1926 = vmatprep.subr.mxu0 0.0
        %1927 = vmatpush1.msra.mxu0 0.0
        %1928 = vmatprep.subr.mxu0 0.0
        %1929 = vmatpush1.msra.mxu0 0.0
        %1930 = vmatprep.subr.mxu0 0.0
        %1931 = vmatpush1.msra.mxu0 0.0
        %1932 = vmatprep.subr.mxu0 0.0
        %1933 = vmatpush1.msra.mxu0 0.0
        %1934 = vmatprep.subr.mxu0 0.0
        %1935 = vmatpush1.msra.mxu0 0.0
        %1936 = vmatprep.subr.mxu0 0.0
        %1937 = vmatpush1.msra.mxu0 0.0
        %1938 = vmatprep.subr.mxu0 0.0
        %1939 = vmatpush1.msra.mxu0 0.0
        %1940 = vmatprep.subr.mxu0 0.0
        %1941 = vmatpush1.msra.mxu0 0.0
        %1942 = vmatprep.subr.mxu0 0.0
        %1943 = vmatpush1.msra.mxu0 0.0
        %1944 = vmatprep.subr.mxu0 0.0
        %1945 = vmatpush1.msra.mxu0 0.0
        %1946 = vmatprep.subr.mxu0 0.0
        %1947 = vmatpush1.msra.mxu0 0.0
        %1948 = vmatprep.subr.mxu0 0.0
        %1949 = vmatpush1.msra.mxu0 0.0
        %1950 = vmatprep.subr.mxu0 0.0
        %1951 = vmatpush1.msra.mxu0 %v1346
        %1952 = vmatprep.subr.mxu0 0.0
        %1953 = vmatpush2.msra.mxu0 0.0
        %1954 = vmatprep.subr.mxu0 0.0
        %1955 = vmatpush2.msra.mxu0 0.0
        %1956 = vmatprep.subr.mxu0 0.0
        %1957 = vmatpush2.msra.mxu0 0.0
        %1958 = vmatprep.subr.mxu0 0.0
        %1959 = vmatpush2.msra.mxu0 0.0
        %1960 = vmatprep.subr.mxu0 0.0
        %1961 = vmatpush2.msra.mxu0 0.0
        %1962 = vmatprep.subr.mxu0 0.0
        %1963 = vmatpush2.msra.mxu0 0.0
        %1964 = vmatprep.subr.mxu0 0.0
        %1965 = vmatpush2.msra.mxu0 0.0
        %1966 = vmatprep.subr.mxu0 0.0
        %1967 = vmatpush2.msra.mxu0 0.0
        %1968 = vmatprep.subr.mxu0 0.0
        %1969 = vmatpush2.msra.mxu0 0.0
        %1970 = vmatprep.subr.mxu0 0.0
        %1971 = vmatpush2.msra.mxu0 0.0
        %1972 = vmatprep.subr.mxu0 0.0
        %1973 = vmatpush2.msra.mxu0 0.0
        %1974 = vmatprep.subr.mxu0 0.0
        %1975 = vmatpush2.msra.mxu0 0.0
        %1976 = vmatprep.subr.mxu0 0.0
        %1977 = vmatpush2.msra.mxu0 0.0
        %1978 = vmatprep.subr.mxu0 0.0
        %1979 = vmatpush2.msra.mxu0 0.0
        %1980 = vmatprep.subr.mxu0 0.0
        %1981 = vmatpush2.msra.mxu0 0.0
        %1982 = vmatprep.subr.mxu0 0.0
        %1983 = vmatpush2.msra.mxu0 0.0
        %1984 = vmatprep.mubr.f32.mxu0 0.0
        %1985 = vmatmul.mubr.f32.gmra.mxu0 %v1918
        %v1986 = vpop.f32.mrf.mxu0
        %v1987 = vadd.f32 0.0, %v1986
        %v1988 = vpop.f32.mrf.mxu0
        %1989 = vdwg.mxu0
        %1990 = vst.msk [vmem:[#allocation2] sm:$0xff] %vm1349, %v1768
        %1992 = vrot.lane.b32.xlu0 %v1841, 8
        %v1993 = vpop.permute.xlu0 %1992
        %vm1995 = vcmask 130112
        %1996 = vst.msk [vmem:[#allocation2] sm:$0xff] %vm1995, %v1993
        %1998 = vrot.lane.b32.xlu0 %v1914, 16
        %v1999 = vpop.permute.xlu0 %1998
        %vm2001 = vcmask 195712
        %2002 = vst.msk [vmem:[#allocation2] sm:$0xff] %vm2001, %v1999
        %2004 = vrot.lane.b32.xlu0 %v1987, 24
        %v2005 = vpop.permute.xlu0 %2004
        %vm2007 = vcmask 261312
        %2008 = vst.msk [vmem:[#allocation2] sm:$0xff] %vm2007, %v2005
        %v2009 = vld [vmem:[#allocation2] sm:$0xff]
        %v2010 = vadd.f32 %v2009, %v388
        %v2011 = vsel %vm463, %v2010, 0.0
        %2012 = vadd.xlane.f32.xlu0 %v2011
        %v2013 = vpop.xlane.xlu0 %2012
        %v2014 = vrcp.pop 32.0
        %v2015 = vmul.f32 %v2013, %v2014
        %v2016 = vsub.f32 %v2010, %v2015
        %v2017 = vmul.f32 %v2016, %v2016
        %v2018 = vsel %vm463, %v2017, 0.0
        %2019 = vadd.xlane.f32.xlu0 %v2018
        %v2020 = vpop.xlane.xlu0 %2019
        %v2021 = vmul.f32 %v2020, %v2014
        %v2022 = vadd.f32 %v2021, 1e-06
        %v2023 = vrsqrt.pop %v2022
        %v2024 = vmul.f32 %v2016, %v2023
        %v2026 = vlaneseq
        %v2027 = vshrl.u32 %v2026, 7
        %v2028 = vsub.s32 0, %v2027
        %v2029 = vrot.slane %v386, %v2028
        %v2031 = vmul.f32 %v2024, %v2029
        %v2033 = vlaneseq
        %v2034 = vshrl.u32 %v2033, 7
        %v2035 = vsub.s32 0, %v2034
        %v2036 = vrot.slane %v387, %v2035
        %v2038 = vadd.f32 %v2031, %v2036
        %2039 = vst.msk [vmem:[%s357] sm:$0xff] %vm463, %v2038
        %s2040 = sand.u32 %s197, 1
        %s2041 = scalar_lea.sflag [#allocation5], %s2040
        %s2042 = sand.u32 %s197, 1
        %s2043 = smul.addr %s2042, 8
        %s2044 = scalar_lea.vmem [#allocation9], %s2043
        // Predicated region
        $region61: #{tpu_custom_call.1} parent=47 // pred_check
          %p2045 = pneg %p207
        $region62: #{tpu_custom_call.1} parent=47 // pred_check_branch
          %2047 = sbr.rel (%p2045) target = $region64
        $region63: #{tpu_custom_call.1} parent=47 // pred_region
          %s2049 = ssub.s32 128, 128
          %2050 = vsyncadd %s2041, %s2049
          %s2051 = smul.addr %s27, 128
          %s2052 = scalar_lea.hbm %s7, %s2051
          %s2054 = sshll.u32 %s2044, 4
          %s2055 = int_to_ptr.vmem [resolvable:$true] %s2054
          %2057 = dma.vmem_to_hbm [thread:$0]  %s2055, 128, %s2052, %s2041
        $region64: #{tpu_custom_call.1} parent=47 // pred_fallthru
          _
      $region48: #{tpu_custom_call.1} parent=5 // pred_fallthru
        _
      %p2058 = scmp.le.s32.totalorder 2, %s22
      // Predicated region
      $region65: #{tpu_custom_call.1} parent=5 // pred_check
        %p2059 = pneg %p2058
      $region66: #{tpu_custom_call.1} parent=5 // pred_check_branch
        %2061 = sbr.rel (%p2059) target = $region68
      $region67: #{tpu_custom_call.1} parent=5 // pred_region
        %s2062 = ssub.s32 %s22, 2
        // Predicated region
        $region69: #{tpu_custom_call.1} parent=67 // pred_check
          %p2063 = pneg %p213
        $region70: #{tpu_custom_call.1} parent=67 // pred_check_branch
          %2065 = sbr.rel (%p2063) target = $region72
        $region71: #{tpu_custom_call.1} parent=67 // pred_region
          %s2066 = sand.u32 %s198, 1
          %s2067 = scalar_lea.sflag [#allocation5], %s2066
          %s2068 = sand.u32 %s198, 1
          %s2069 = smul.addr %s2068, 8
          %s2070 = scalar_lea.vmem [#allocation9], %s2069
          %2071 = dma.done %s2067, 128
        $region72: #{tpu_custom_call.1} parent=67 // pred_fallthru
          _
      $region68: #{tpu_custom_call.1} parent=5 // pred_fallthru
        _
    $region6: #{tpu_custom_call.1} parent=1 // loop_footer
      %s26 = sadd.s32 1, %s22
    $region7: #{tpu_custom_call.1} parent=1 // loop_footer_branch
      %21 = sbr.rel target = $region3
    $region8: #{tpu_custom_call.1} parent=1 // loop_exit
      _
    %2072 = vsyncpa [#allocation4], 1
    %s2073 = scalar_lea.sflag [#allocation4], 1
    %2074 = vsyncpa %s2073, 1
    %2075 = vsyncpa [#allocation7], 1
    %s2076 = scalar_lea.sflag [#allocation7], 1
    %2077 = vsyncpa %s2076, 1
    %2078 = vsyncpa [#allocation5], 1
    %s2079 = scalar_lea.sflag [#allocation5], 1
    %2080 = vsyncpa %s2079, 1

</llo_original>
